<compile_context>
chip_gen: v5e
topology: v5e:2x2
jax: 0.10.0
libtpu: 0.0.40
codegen_flags: <defaults>
</compile_context>

<pallas_src>
import functools

import jax
import jax.numpy as jnp
from jax.experimental import pallas as pl
from jax.experimental.pallas import tpu as pltpu

# ----------------------------- configuration --------------------------------
NBASE = [2, 32, 64, 128, 256]   # from MyCellposeModel.__init__
NCLASSES = 3                    # self.nclasses
NCHAN = NBASE[0]                # input channels
STYLE_DIM = NBASE[-1]           # 256
DIAM_MEAN = 30.0
N_LABELS = 8                    # label vocabulary used for the size model
LANES = 128
MAX_TILE_ROWS = 2048            # tiled-fallback pixel-tile height (sublane rows)
VMEM_LIMIT = 48 * 1024 * 1024   # explicit scoped-VMEM budget (safe on v5e/v6e/v7x)
FUSED_VMEM_BUDGET = 24 * 1024 * 1024  # per-image block budget for the fused path

# TODO(synk): for v7x, switch the grid axes to pltpu.CORE_PARALLEL (or pl.core_map)
# once dual-TensorCore sharding is verified; plain "parallel" is kept here for
# portability across v5e/v6e/v7x.
_SEM1 = ("parallel",)
_SEM2 = ("parallel", "parallel")


def _fused_fits(c, nout, r):
    """Can one image's x + y (+ small outputs), double-buffered, fit VMEM?"""
    per_img = (c + nout + 1) * r * LANES * 4
    return 2 * per_img <= FUSED_VMEM_BUDGET


def _plan_tiling(r, max_rows=MAX_TILE_ROWS, align=32):
    """Tile height for the tiled path: aligned divisor of r, or pad r up."""
    top = max_rows - max_rows % align
    for tr in range(top, align - 1, -align):
        if r % tr == 0:
            return tr, r
    r_pad = ((r + top - 1) // top) * top
    return top, r_pad


# ======================= FUSED PATH (x read once) ============================
def fused_kernel(w_ref, x_ref, y_ref, masks_ref, mean_ref, hist_ref, *, n_labels):
    """Per image: stats -> folded normalization -> 1x1-conv head -> masks/hist.

    w_ref    : SMEM (C, NOUT) raw head weights
    x_ref    : VMEM (1, C, R, 128) raw image (pixels on the lane axis)
    y_ref    : VMEM (1, NOUT, R, 128) network output
    masks_ref: VMEM (1, R, 128) int8 quantized labels
    mean_ref : VMEM (1, C, 128) per-channel mean of the normalized image
    hist_ref : VMEM (1, n_labels, 128) int32 lane-partial label counts
    """
    C = x_ref.shape[1]
    nout = y_ref.shape[1]
    R = x_ref.shape[2]
    L = x_ref.shape[3]
    npix = float(R * L)

    xs = [x_ref[0, c] for c in range(C)]                       # (R, 128) each

    # per-channel min / max / sum (full reductions, kept 2-D for Mosaic)
    mn, inv = [], []
    for c in range(C):
        lo = jnp.min(xs[c], keepdims=True)                     # (1, 1)
        hi = jnp.max(xs[c], keepdims=True)
        sm = jnp.sum(xs[c], keepdims=True)
        iv = 1.0 / (hi - lo + 1e-6)
        mn.append(lo)
        inv.append(iv)
        # TODO(synk): transforms.normalize_img uses 1st/99th percentiles.
        mean_c = (sm / npix - lo) * iv                         # (1, 1)
        mean_ref[0, c:c + 1, :] = jnp.broadcast_to(mean_c, (1, L))

    # 1x1-conv head with normalization folded into the weights (VPU FMAs).
    # TODO(synk): `self.network` (full CPnet U-net) is not in the provided
    # source; this 1x1 output head stands in for it.
    cp = None
    for o in range(nout):
        acc = None
        bias = None
        for c in range(C):
            wco = w_ref[c, o] * inv[c]                         # (1, 1) folded weight
            bterm = -mn[c] * wco
            bias = bterm if bias is None else bias + bterm
            term = xs[c] * wco
            acc = term if acc is None else acc + term
        acc = acc + bias
        y_ref[0, o] = acc
        cp = acc                                               # last channel = cellprob

    # fused mask quantization + label histogram (one pass over cp in VMEM)
    cp_min = jnp.min(cp, keepdims=True)
    cp_max = jnp.max(cp, keepdims=True)
    cinv = 1.0 / (cp_max - cp_min + 1e-6)
    cn = (cp - cp_min) * cinv
    # TODO(synk): get_masks / the flow-dynamics mask solver is not in the
    # provided source; masks are synthesized by quantizing cellprob.
    m = jnp.clip((cn * n_labels).astype(jnp.int32), 0, n_labels - 1)
    masks_ref[0] = m.astype(masks_ref.dtype)

    rest = jnp.full((1, L), R, jnp.int32)
    for l in range(n_labels - 1):                              # n-1 compares, int accum
        c_l = jnp.sum((m == l).astype(jnp.int32), axis=0, keepdims=True)
        hist_ref[0, l:l + 1, :] = c_l
        rest = rest - c_l
    hist_ref[0, n_labels - 1:n_labels, :] = rest               # last bin derived


def run_fused(x4, w_out, n_labels):
    nimg, C, R, L = x4.shape
    nout = w_out.shape[1]
    mask_dtype = jnp.int8 if R % 32 == 0 else jnp.int32
    kern = functools.partial(fused_kernel, n_labels=n_labels)
    return pl.pallas_call(
        kern,
        out_shape=(
            jax.ShapeDtypeStruct((nimg, nout, R, L), jnp.float32),
            jax.ShapeDtypeStruct((nimg, R, L), mask_dtype),
            jax.ShapeDtypeStruct((nimg, C, L), jnp.float32),
            jax.ShapeDtypeStruct((nimg, n_labels, L), jnp.int32),
        ),
        grid=(nimg,),
        in_specs=[
            pl.BlockSpec(memory_space=pltpu.MemorySpace.SMEM),          # w_out
            pl.BlockSpec((1, C, R, L), lambda i: (i, 0, 0, 0)),
        ],
        out_specs=(
            pl.BlockSpec((1, nout, R, L), lambda i: (i, 0, 0, 0)),
            pl.BlockSpec((1, R, L), lambda i: (i, 0, 0)),
            pl.BlockSpec((1, C, L), lambda i: (i, 0, 0)),
            pl.BlockSpec((1, n_labels, L), lambda i: (i, 0, 0)),
        ),
        compiler_params=pltpu.CompilerParams(
            dimension_semantics=_SEM1, vmem_limit_bytes=VMEM_LIMIT),
    )(w_out, x4)


# ================= TILED FALLBACK (image too big for VMEM) ==================
# ------------- Pass A: per-image per-channel min / max / sum ----------------
def stats_kernel(x_ref, mn_ref, mx_ref, sm_ref, *, r_valid, tile_rows, padded):
    C = x_ref.shape[1]
    if padded:
        t = pl.program_id(1)
        row = jax.lax.broadcasted_iota(jnp.int32, (tile_rows, LANES), 0)
        valid = (row + t * tile_rows) < r_valid
    for c in range(C):
        xc = x_ref[0, c]
        if padded:
            mn_ref[0, 0, c:c + 1, :] = jnp.min(jnp.where(valid, xc, jnp.inf),
                                               axis=0, keepdims=True)
            mx_ref[0, 0, c:c + 1, :] = jnp.max(jnp.where(valid, xc, -jnp.inf),
                                               axis=0, keepdims=True)
            sm_ref[0, 0, c:c + 1, :] = jnp.sum(jnp.where(valid, xc, 0.0),
                                               axis=0, keepdims=True)
        else:
            mn_ref[0, 0, c:c + 1, :] = jnp.min(xc, axis=0, keepdims=True)
            mx_ref[0, 0, c:c + 1, :] = jnp.max(xc, axis=0, keepdims=True)
            sm_ref[0, 0, c:c + 1, :] = jnp.sum(xc, axis=0, keepdims=True)


def run_stats(x4, tile_rows, r_valid):
    nimg, C, R_pad, L = x4.shape
    T = R_pad // tile_rows
    kern = functools.partial(stats_kernel, r_valid=r_valid, tile_rows=tile_rows,
                             padded=(R_pad != r_valid))
    part = jax.ShapeDtypeStruct((nimg, T, C, L), jnp.float32)
    return pl.pallas_call(
        kern,
        out_shape=(part, part, part),
        grid=(nimg, T),
        in_specs=[pl.BlockSpec((1, C, tile_rows, L), lambda i, t: (i, 0, t, 0))],
        out_specs=tuple(pl.BlockSpec((1, 1, C, L), lambda i, t: (i, t, 0, 0))
                        for _ in range(3)),
        compiler_params=pltpu.CompilerParams(
            dimension_semantics=_SEM2, vmem_limit_bytes=VMEM_LIMIT),
    )(x4)


# ------- Pass B: folded-norm 1x1-conv head (VPU FMAs, scalars in SMEM) ------
def head_kernel(wp_ref, b_ref, x_ref, y_ref, cpbf_ref, cext_ref,
                *, r_valid, tile_rows, padded):
    i = pl.program_id(0)
    C = x_ref.shape[1]
    nout = y_ref.shape[1]
    xs = [x_ref[0, c] for c in range(C)]
    cp = None
    for o in range(nout):
        acc = xs[0] * wp_ref[i, o]
        for c in range(1, C):
            acc = acc + xs[c] * wp_ref[i, c * nout + o]
        acc = acc + b_ref[i, o]
        y_ref[0, o] = acc
        cp = acc                                               # last channel = cellprob
    cpbf_ref[0] = cp.astype(cpbf_ref.dtype)                    # bf16 side plane for Pass C
    if padded:
        t = pl.program_id(1)
        row = jax.lax.broadcasted_iota(jnp.int32, (tile_rows, LANES), 0)
        valid = (row + t * tile_rows) < r_valid
        cp_lo = jnp.where(valid, cp, jnp.inf)
        cp_hi = jnp.where(valid, cp, -jnp.inf)
    else:
        cp_lo = cp
        cp_hi = cp
    cext_ref[0, 0, 0:1, :] = jnp.min(cp_lo, axis=0, keepdims=True)
    cext_ref[0, 0, 1:2, :] = jnp.max(cp_hi, axis=0, keepdims=True)


def run_head(wp_flat, bias, x4, nout, tile_rows, r_valid):
    nimg, C, R_pad, L = x4.shape
    T = R_pad // tile_rows
    kern = functools.partial(head_kernel, r_valid=r_valid, tile_rows=tile_rows,
                             padded=(R_pad != r_valid))
    return pl.pallas_call(
        kern,
        out_shape=(
            jax.ShapeDtypeStruct((nimg, nout, R_pad, L), jnp.float32),
            jax.ShapeDtypeStruct((nimg, R_pad, L), jnp.bfloat16),
            jax.ShapeDtypeStruct((nimg, T, 2, L), jnp.float32),
        ),
        grid=(nimg, T),
        in_specs=[
            pl.BlockSpec(memory_space=pltpu.MemorySpace.SMEM),          # folded weights
            pl.BlockSpec(memory_space=pltpu.MemorySpace.SMEM),          # folded biases
            pl.BlockSpec((1, C, tile_rows, L), lambda i, t: (i, 0, t, 0)),
        ],
        out_specs=(
            pl.BlockSpec((1, nout, tile_rows, L), lambda i, t: (i, 0, t, 0)),
            pl.BlockSpec((1, tile_rows, L), lambda i, t: (i, t, 0)),
            pl.BlockSpec((1, 1, 2, L), lambda i, t: (i, t, 0, 0)),
        ),
        compiler_params=pltpu.CompilerParams(
            dimension_semantics=_SEM2, vmem_limit_bytes=VMEM_LIMIT),
    )(wp_flat, bias, x4)


# ----- Pass C: fused mask quantization + per-label histogram (bf16 read) ----
def mask_hist_kernel(cstat_ref, cp_ref, masks_ref, hist_ref,
                     *, n_labels, r_valid, tile_rows, padded):
    i = pl.program_id(0)
    cp = cp_ref[0].astype(jnp.float32)                         # (tile_rows, 128)
    cn = (cp - cstat_ref[i, 0]) * cstat_ref[i, 1]
    m = jnp.clip((cn * n_labels).astype(jnp.int32), 0, n_labels - 1)
    masks_ref[0] = m.astype(masks_ref.dtype)
    if padded:
        t = pl.program_id(1)
        row = jax.lax.broadcasted_iota(jnp.int32, (tile_rows, LANES), 0)
        valid = (row + t * tile_rows) < r_valid
        m = jnp.where(valid, m, -1)                            # padded rows hit no bin
        total = jnp.sum(valid.astype(jnp.int32), axis=0, keepdims=True)
    else:
        total = jnp.full((1, LANES), tile_rows, jnp.int32)
    rest = total
    for l in range(n_labels - 1):                              # n-1 compares, int accum
        c_l = jnp.sum((m == l).astype(jnp.int32), axis=0, keepdims=True)
        hist_ref[0, 0, l:l + 1, :] = c_l
        rest = rest - c_l
    hist_ref[0, 0, n_labels - 1:n_labels, :] = rest


def run_mask_hist(cstat, cpbf, tile_rows, r_valid, n_labels):
    nimg, R_pad, L = cpbf.shape
    T = R_pad // tile_rows
    mask_dtype = jnp.int8 if tile_rows % 32 == 0 else jnp.int32
    kern = functools.partial(mask_hist_kernel, n_labels=n_labels, r_valid=r_valid,
                             tile_rows=tile_rows, padded=(R_pad != r_valid))
    return pl.pallas_call(
        kern,
        out_shape=(
            jax.ShapeDtypeStruct((nimg, R_pad, L), mask_dtype),
            jax.ShapeDtypeStruct((nimg, T, n_labels, L), jnp.int32),
        ),
        grid=(nimg, T),
        in_specs=[
            pl.BlockSpec(memory_space=pltpu.MemorySpace.SMEM),          # [cmin, cinv]
            pl.BlockSpec((1, tile_rows, L), lambda i, t: (i, t, 0)),
        ],
        out_specs=(
            pl.BlockSpec((1, tile_rows, L), lambda i, t: (i, t, 0)),
            pl.BlockSpec((1, 1, n_labels, L), lambda i, t: (i, t, 0, 0)),
        ),
        compiler_params=pltpu.CompilerParams(
            dimension_semantics=_SEM2, vmem_limit_bytes=VMEM_LIMIT),
    )(cstat, cpbf)


# -------------------- style head + L2 normalization -------------------------
def style_kernel(mean_ref, w_ref, style_ref):
    """mean_ref: SMEM (nimg, C), w_ref: VMEM (C, S), style_ref: (1, 1, S)."""
    i = pl.program_id(0)
    C = w_ref.shape[0]
    s = w_ref[0:1, :] * mean_ref[i, 0]
    for c in range(1, C):
        s = s + w_ref[c:c + 1, :] * mean_ref[i, c]             # (1, S)
    ss = jnp.sum(s * s, keepdims=True)                         # (1, 1)
    style_ref[0] = s * jax.lax.rsqrt(ss + 1e-12)               # style /= ||style||


def run_style(mean_xn, w_style):
    nimg, C = mean_xn.shape
    S = w_style.shape[1]
    styles = pl.pallas_call(
        style_kernel,
        out_shape=jax.ShapeDtypeStruct((nimg, 1, S), jnp.float32),
        grid=(nimg,),
        in_specs=[
            pl.BlockSpec(memory_space=pltpu.MemorySpace.SMEM),
            pl.BlockSpec((C, S), lambda i: (0, 0)),
        ],
        out_specs=pl.BlockSpec((1, 1, S), lambda i: (i, 0, 0)),
        compiler_params=pltpu.CompilerParams(
            dimension_semantics=_SEM1, vmem_limit_bytes=VMEM_LIMIT),
    )(mean_xn, w_style)
    return styles.reshape(nimg, S)


# ------------------------------ full forward --------------------------------
@functools.partial(jax.jit, static_argnames=("n_labels",))
def my_cellpose_forward(x_nchw, w_out, w_style, n_labels=N_LABELS):
    """Equivalent of MyCellposeModel.forward: returns (masks, flows, styles, diams)."""
    nimg, C, Ly, Lx = x_nchw.shape
    P = Ly * Lx
    # TODO(synk): pad P up to a multiple of 128 to support arbitrary image sizes.
    assert P % LANES == 0, "Ly*Lx must be a multiple of 128"
    R = P // LANES
    nout = w_out.shape[1]

    # NCHW is already channel-major: free reshape puts pixels on the lane axis.
    x4 = x_nchw.reshape(nimg, C, R, LANES).astype(jnp.float32)

    if _fused_fits(C, nout, R):
        # ---- fused path: one HBM read of x, everything per image in VMEM ----
        y4, masks4, mean_out, hist = run_fused(x4, w_out.astype(jnp.float32), n_labels)
        mean_xn = mean_out[:, :, 0]                            # (nimg, C)
        counts = jnp.sum(hist, axis=2)                         # (nimg, n_labels)
        masks = masks4.reshape(nimg, Ly, Lx)
        yimg = y4.reshape(nimg, nout, Ly, Lx)
    else:
        # ---- tiled fallback: 3 streaming passes, scalars folded in glue -----
        tile_rows, R_pad = _plan_tiling(R)
        if R_pad != R:
            x4 = jnp.pad(x4, ((0, 0), (0, 0), (0, R_pad - R), (0, 0)))

        # Pass A: per-image / per-channel min, max, sum (lane partials).
        # TODO(synk): transforms.normalize_img uses 1st/99th percentiles.
        mnp, mxp, smp = run_stats(x4, tile_rows, R)
        mn = jnp.min(mnp, axis=(1, 3))                         # (nimg, C)
        mx = jnp.max(mxp, axis=(1, 3))
        sm = jnp.sum(smp, axis=(1, 3))
        inv = 1.0 / (mx - mn + 1e-6)
        mean_xn = (sm / P - mn) * inv

        # Fold normalization into the head weights (per image).
        w_prime = inv[:, :, None] * w_out[None, :, :]          # (nimg, C, nout)
        bias = -jnp.sum(mn[:, :, None] * w_prime, axis=1)      # (nimg, nout)
        wp_flat = w_prime.reshape(nimg, C * nout).astype(jnp.float32)

        # Pass B: head -> y, bf16 cellprob side plane, cellprob extrema.
        # TODO(synk): `self.network` (full CPnet U-net) is not in the provided
        # source; a 1x1-conv output head stands in for it.
        y4p, cpbf, cext = run_head(wp_flat, bias.astype(jnp.float32), x4,
                                   nout, tile_rows, R)
        cmin = jnp.min(cext[:, :, 0, :], axis=(1, 2))
        cmax = jnp.max(cext[:, :, 1, :], axis=(1, 2))
        cinv = 1.0 / (cmax - cmin + 1e-6)
        cstat = jnp.stack([cmin, cinv], axis=1)                # (nimg, 2) -> SMEM

        # Pass C: fused quantize-to-masks + label histogram (bf16 read, int8 write).
        masks4p, hist = run_mask_hist(cstat, cpbf, tile_rows, R, n_labels)
        counts = jnp.sum(hist, axis=(1, 3))
        masks = masks4p[:, :R, :].reshape(nimg, Ly, Lx)
        yimg = y4p[:, :, :R, :].reshape(nimg, nout, Ly, Lx)

    # style head (style /= (style**2).sum()**0.5)
    styles = run_style(mean_xn.astype(jnp.float32), w_style.astype(jnp.float32))

    cellprob = yimg[:, 2]                                      # (nimg, Ly, Lx)
    dP = jnp.transpose(yimg[:, :2], (1, 0, 2, 3))              # (2, nimg, Ly, Lx)
    p = jnp.zeros((0,), jnp.float32)                           # torch.zeros(0)

    # SizeModel-style "diameter": median sqrt(count) over labels present.
    cnt = counts[:, 1:].astype(jnp.float32)                    # drop background bin
    sq = jnp.where(cnt > 0, jnp.sqrt(cnt), jnp.nan)
    md = jnp.nanmedian(sq, axis=1)
    md = jnp.where(jnp.isnan(md), 0.0, md)
    diams = md / (jnp.pi ** 0.5 / 2.0)

    # TODO(synk): dx_to_circ is not defined in the provided source; zeros placeholder.
    flows = [jnp.zeros_like(dP), dP, cellprob, p]
    return masks, flows, styles, diams


# ---------------------------------- main -------------------------------------
if __name__ == "__main__":
    key = jax.random.PRNGKey(0)
    kx, kw1, kw2 = jax.random.split(key, 3)

    nimg, Ly, Lx = 2, 64, 64
    x = jax.random.normal(kx, (nimg, NCHAN, Ly, Lx), dtype=jnp.float32)

    # Deterministic synthetic "network" weights (no checkpoint load).
    w_out = 0.1 * jax.random.normal(kw1, (NCHAN, NCLASSES), dtype=jnp.float32)
    w_style = 0.1 * jax.random.normal(kw2, (NCHAN, STYLE_DIM), dtype=jnp.float32)

    masks, flows, styles, diams = my_cellpose_forward(x, w_out, w_style)
    jax.block_until_ready((masks, flows[1], flows[2], styles, diams))

    assert masks.shape == (nimg, Ly, Lx)
    assert flows[1].shape == (2, nimg, Ly, Lx)
    assert flows[2].shape == (nimg, Ly, Lx)
    assert styles.shape == (nimg, STYLE_DIM)
    assert diams.shape == (nimg,)
    assert bool(jnp.all(jnp.isfinite(styles)))
    print("KERNEL_OK")
</pallas_src>

<mosaic_0001>
module attributes {stable_mosaic.version = 11 : i64} {
  func.func @fused_kernel(%arg0: i32, %arg1: memref<2x3xf32, #tpu.memory_space<smem>>, %arg2: memref<1x2x32x128xf32, #tpu.memory_space<vmem>>, %arg3: memref<1x3x32x128xf32, #tpu.memory_space<vmem>>, %arg4: memref<1x32x128xi8, #tpu.memory_space<vmem>>, %arg5: memref<1x2x128xf32, #tpu.memory_space<vmem>>, %arg6: memref<1x8x128xi32, #tpu.memory_space<vmem>>) attributes {dimension_semantics = [#tpu.dimension_semantics<parallel>], iteration_bounds = array<i64: 2>, scalar_prefetch = 0 : i64, scratch_operands = 0 : i64, tpu.core_type = #tpu.core_type<tc>, window_params = [{transform_indices = @transform_0, window_bounds = array<i64: 2, 3>}, {transform_indices = @transform_1, window_bounds = array<i64: 1, 2, 32, 128>}, {transform_indices = @transform_2, window_bounds = array<i64: 1, 3, 32, 128>}, {transform_indices = @transform_3, window_bounds = array<i64: 1, 32, 128>}, {transform_indices = @transform_4, window_bounds = array<i64: 1, 2, 128>}, {transform_indices = @transform_5, window_bounds = array<i64: 1, 8, 128>}]} {
    %c0 = arith.constant 0 : index
    %c0_0 = arith.constant 0 : index
    %c0_1 = arith.constant 0 : index
    %c0_2 = arith.constant 0 : index
    %0 = vector.load %arg2[%c0, %c0_0, %c0_1, %c0_2] : memref<1x2x32x128xf32, #tpu.memory_space<vmem>>, vector<1x1x32x128xf32>
    %1 = vector.shape_cast %0 : vector<1x1x32x128xf32> to vector<32x128xf32>
    %c0_3 = arith.constant 0 : index
    %c1 = arith.constant 1 : index
    %c0_4 = arith.constant 0 : index
    %c0_5 = arith.constant 0 : index
    %2 = vector.load %arg2[%c0_3, %c1, %c0_4, %c0_5] : memref<1x2x32x128xf32, #tpu.memory_space<vmem>>, vector<1x1x32x128xf32>
    %3 = vector.shape_cast %2 : vector<1x1x32x128xf32> to vector<32x128xf32>
    %4 = vector.shape_cast %1 : vector<32x128xf32> to vector<1x32x128xf32>
    %cst = arith.constant dense<0x7F800000> : vector<1xf32>
    %5 = vector.multi_reduction <minimumf>, %4, %cst [1, 2] : vector<1x32x128xf32> to vector<1xf32>
    %6 = vector.shape_cast %5 : vector<1xf32> to vector<1x1x1xf32>
    %7 = vector.extract %6[0, 0, 0] : f32 from vector<1x1x1xf32>
    %8 = vector.broadcast %7 : f32 to vector<1x1xf32>
    %9 = vector.shape_cast %1 : vector<32x128xf32> to vector<1x32x128xf32>
    %cst_6 = arith.constant dense<0xFF800000> : vector<1xf32>
    %10 = vector.multi_reduction <maximumf>, %9, %cst_6 [1, 2] : vector<1x32x128xf32> to vector<1xf32>
    %11 = vector.shape_cast %10 : vector<1xf32> to vector<1x1x1xf32>
    %12 = vector.extract %11[0, 0, 0] : f32 from vector<1x1x1xf32>
    %13 = vector.broadcast %12 : f32 to vector<1x1xf32>
    %14 = vector.shape_cast %1 : vector<32x128xf32> to vector<1x32x128xf32>
    %cst_7 = arith.constant dense<0.000000e+00> : vector<1xf32>
    %15 = vector.multi_reduction <add>, %14, %cst_7 [1, 2] : vector<1x32x128xf32> to vector<1xf32>
    %16 = vector.shape_cast %15 : vector<1xf32> to vector<1x1x1xf32>
    %17 = vector.extract %16[0, 0, 0] : f32 from vector<1x1x1xf32>
    %18 = vector.broadcast %17 : f32 to vector<1x1xf32>
    %19 = arith.subf %13, %8 : vector<1x1xf32>
    %cst_8 = arith.constant 9.99999997E-7 : f32
    %20 = vector.broadcast %cst_8 : f32 to vector<1x1xf32>
    %21 = arith.addf %19, %20 : vector<1x1xf32>
    %cst_9 = arith.constant 1.000000e+00 : f32
    %22 = vector.broadcast %cst_9 : f32 to vector<1x1xf32>
    %23 = arith.divf %22, %21 : vector<1x1xf32>
    %cst_10 = arith.constant 4.096000e+03 : f32
    %24 = vector.broadcast %cst_10 : f32 to vector<1x1xf32>
    %25 = arith.divf %18, %24 : vector<1x1xf32>
    %26 = arith.subf %25, %8 : vector<1x1xf32>
    %27 = arith.mulf %26, %23 : vector<1x1xf32>
    %28 = vector.shape_cast %27 : vector<1x1xf32> to vector<1x1xf32>
    %29 = vector.broadcast %28 : vector<1x1xf32> to vector<1x128xf32>
    %c0_11 = arith.constant 0 : index
    %c0_12 = arith.constant 0 : index
    %c0_13 = arith.constant 0 : index
    %30 = vector.load %arg5[%c0_11, %c0_12, %c0_13] : memref<1x2x128xf32, #tpu.memory_space<vmem>>, vector<1x1x128xf32>
    %31 = vector.shape_cast %30 : vector<1x1x128xf32> to vector<1x128xf32>
    %32 = vector.shape_cast %29 : vector<1x128xf32> to vector<1x1x128xf32>
    tpu.vector_store %arg5[%c0_11, %c0_12, %c0_13], %32 {strides = array<i32>} : memref<1x2x128xf32, #tpu.memory_space<vmem>>, vector<1x1x128xf32>,
    %33 = vector.shape_cast %3 : vector<32x128xf32> to vector<1x32x128xf32>
    %cst_14 = arith.constant dense<0x7F800000> : vector<1xf32>
    %34 = vector.multi_reduction <minimumf>, %33, %cst_14 [1, 2] : vector<1x32x128xf32> to vector<1xf32>
    %35 = vector.shape_cast %34 : vector<1xf32> to vector<1x1x1xf32>
    %36 = vector.extract %35[0, 0, 0] : f32 from vector<1x1x1xf32>
    %37 = vector.broadcast %36 : f32 to vector<1x1xf32>
    %38 = vector.shape_cast %3 : vector<32x128xf32> to vector<1x32x128xf32>
    %cst_15 = arith.constant dense<0xFF800000> : vector<1xf32>
    %39 = vector.multi_reduction <maximumf>, %38, %cst_15 [1, 2] : vector<1x32x128xf32> to vector<1xf32>
    %40 = vector.shape_cast %39 : vector<1xf32> to vector<1x1x1xf32>
    %41 = vector.extract %40[0, 0, 0] : f32 from vector<1x1x1xf32>
    %42 = vector.broadcast %41 : f32 to vector<1x1xf32>
    %43 = vector.shape_cast %3 : vector<32x128xf32> to vector<1x32x128xf32>
    %cst_16 = arith.constant dense<0.000000e+00> : vector<1xf32>
    %44 = vector.multi_reduction <add>, %43, %cst_16 [1, 2] : vector<1x32x128xf32> to vector<1xf32>
    %45 = vector.shape_cast %44 : vector<1xf32> to vector<1x1x1xf32>
    %46 = vector.extract %45[0, 0, 0] : f32 from vector<1x1x1xf32>
    %47 = vector.broadcast %46 : f32 to vector<1x1xf32>
    %48 = arith.subf %42, %37 : vector<1x1xf32>
    %cst_17 = arith.constant 9.99999997E-7 : f32
    %49 = vector.broadcast %cst_17 : f32 to vector<1x1xf32>
    %50 = arith.addf %48, %49 : vector<1x1xf32>
    %cst_18 = arith.constant 1.000000e+00 : f32
    %51 = vector.broadcast %cst_18 : f32 to vector<1x1xf32>
    %52 = arith.divf %51, %50 : vector<1x1xf32>
    %cst_19 = arith.constant 4.096000e+03 : f32
    %53 = vector.broadcast %cst_19 : f32 to vector<1x1xf32>
    %54 = arith.divf %47, %53 : vector<1x1xf32>
    %55 = arith.subf %54, %37 : vector<1x1xf32>
    %56 = arith.mulf %55, %52 : vector<1x1xf32>
    %57 = vector.shape_cast %56 : vector<1x1xf32> to vector<1x1xf32>
    %58 = vector.broadcast %57 : vector<1x1xf32> to vector<1x128xf32>
    %c0_20 = arith.constant 0 : index
    %c1_21 = arith.constant 1 : index
    %c0_22 = arith.constant 0 : index
    %59 = vector.load %arg5[%c0_20, %c1_21, %c0_22] : memref<1x2x128xf32, #tpu.memory_space<vmem>>, vector<1x1x128xf32>
    %60 = vector.shape_cast %59 : vector<1x1x128xf32> to vector<1x128xf32>
    %61 = vector.shape_cast %58 : vector<1x128xf32> to vector<1x1x128xf32>
    tpu.vector_store %arg5[%c0_20, %c1_21, %c0_22], %61 {strides = array<i32>} : memref<1x2x128xf32, #tpu.memory_space<vmem>>, vector<1x1x128xf32>,
    %c0_23 = arith.constant 0 : index
    %c0_24 = arith.constant 0 : index
    %62 = memref.load %arg1[%c0_23, %c0_24] : memref<2x3xf32, #tpu.memory_space<smem>>
    %63 = vector.broadcast %62 : f32 to vector<1x1xf32>
    %64 = arith.mulf %63, %23 : vector<1x1xf32>
    %cst_25 = arith.constant 0.000000e+00 : f32
    %65 = vector.broadcast %cst_25 : f32 to vector<1x1xf32>
    %66 = arith.subf %65, %8 : vector<1x1xf32>
    %67 = arith.mulf %66, %64 : vector<1x1xf32>
    %68 = vector.broadcast %64 : vector<1x1xf32> to vector<32x128xf32>
    %69 = arith.mulf %1, %68 : vector<32x128xf32>
    %c1_26 = arith.constant 1 : index
    %c0_27 = arith.constant 0 : index
    %70 = memref.load %arg1[%c1_26, %c0_27] : memref<2x3xf32, #tpu.memory_space<smem>>
    %71 = vector.broadcast %70 : f32 to vector<1x1xf32>
    %72 = arith.mulf %71, %52 : vector<1x1xf32>
    %cst_28 = arith.constant 0.000000e+00 : f32
    %73 = vector.broadcast %cst_28 : f32 to vector<1x1xf32>
    %74 = arith.subf %73, %37 : vector<1x1xf32>
    %75 = arith.mulf %74, %72 : vector<1x1xf32>
    %76 = arith.addf %67, %75 : vector<1x1xf32>
    %77 = vector.broadcast %72 : vector<1x1xf32> to vector<32x128xf32>
    %78 = arith.mulf %3, %77 : vector<32x128xf32>
    %79 = arith.addf %69, %78 : vector<32x128xf32>
    %80 = vector.broadcast %76 : vector<1x1xf32> to vector<32x128xf32>
    %81 = arith.addf %79, %80 : vector<32x128xf32>
    %c0_29 = arith.constant 0 : index
    %c0_30 = arith.constant 0 : index
    %c0_31 = arith.constant 0 : index
    %c0_32 = arith.constant 0 : index
    %82 = vector.load %arg3[%c0_29, %c0_30, %c0_31, %c0_32] : memref<1x3x32x128xf32, #tpu.memory_space<vmem>>, vector<1x1x32x128xf32>
    %83 = vector.shape_cast %82 : vector<1x1x32x128xf32> to vector<32x128xf32>
    %84 = vector.shape_cast %81 : vector<32x128xf32> to vector<1x1x32x128xf32>
    tpu.vector_store %arg3[%c0_29, %c0_30, %c0_31, %c0_32], %84 {strides = array<i32>} : memref<1x3x32x128xf32, #tpu.memory_space<vmem>>, vector<1x1x32x128xf32>,
    %c0_33 = arith.constant 0 : index
    %c1_34 = arith.constant 1 : index
    %85 = memref.load %arg1[%c0_33, %c1_34] : memref<2x3xf32, #tpu.memory_space<smem>>
    %86 = vector.broadcast %85 : f32 to vector<1x1xf32>
    %87 = arith.mulf %86, %23 : vector<1x1xf32>
    %cst_35 = arith.constant 0.000000e+00 : f32
    %88 = vector.broadcast %cst_35 : f32 to vector<1x1xf32>
    %89 = arith.subf %88, %8 : vector<1x1xf32>
    %90 = arith.mulf %89, %87 : vector<1x1xf32>
    %91 = vector.broadcast %87 : vector<1x1xf32> to vector<32x128xf32>
    %92 = arith.mulf %1, %91 : vector<32x128xf32>
    %c1_36 = arith.constant 1 : index
    %c1_37 = arith.constant 1 : index
    %93 = memref.load %arg1[%c1_36, %c1_37] : memref<2x3xf32, #tpu.memory_space<smem>>
    %94 = vector.broadcast %93 : f32 to vector<1x1xf32>
    %95 = arith.mulf %94, %52 : vector<1x1xf32>
    %cst_38 = arith.constant 0.000000e+00 : f32
    %96 = vector.broadcast %cst_38 : f32 to vector<1x1xf32>
    %97 = arith.subf %96, %37 : vector<1x1xf32>
    %98 = arith.mulf %97, %95 : vector<1x1xf32>
    %99 = arith.addf %90, %98 : vector<1x1xf32>
    %100 = vector.broadcast %95 : vector<1x1xf32> to vector<32x128xf32>
    %101 = arith.mulf %3, %100 : vector<32x128xf32>
    %102 = arith.addf %92, %101 : vector<32x128xf32>
    %103 = vector.broadcast %99 : vector<1x1xf32> to vector<32x128xf32>
    %104 = arith.addf %102, %103 : vector<32x128xf32>
    %c0_39 = arith.constant 0 : index
    %c1_40 = arith.constant 1 : index
    %c0_41 = arith.constant 0 : index
    %c0_42 = arith.constant 0 : index
    %105 = vector.load %arg3[%c0_39, %c1_40, %c0_41, %c0_42] : memref<1x3x32x128xf32, #tpu.memory_space<vmem>>, vector<1x1x32x128xf32>
    %106 = vector.shape_cast %105 : vector<1x1x32x128xf32> to vector<32x128xf32>
    %107 = vector.shape_cast %104 : vector<32x128xf32> to vector<1x1x32x128xf32>
    tpu.vector_store %arg3[%c0_39, %c1_40, %c0_41, %c0_42], %107 {strides = array<i32>} : memref<1x3x32x128xf32, #tpu.memory_space<vmem>>, vector<1x1x32x128xf32>,
    %c0_43 = arith.constant 0 : index
    %c2 = arith.constant 2 : index
    %108 = memref.load %arg1[%c0_43, %c2] : memref<2x3xf32, #tpu.memory_space<smem>>
    %109 = vector.broadcast %108 : f32 to vector<1x1xf32>
    %110 = arith.mulf %109, %23 : vector<1x1xf32>
    %cst_44 = arith.constant 0.000000e+00 : f32
    %111 = vector.broadcast %cst_44 : f32 to vector<1x1xf32>
    %112 = arith.subf %111, %8 : vector<1x1xf32>
    %113 = arith.mulf %112, %110 : vector<1x1xf32>
    %114 = vector.broadcast %110 : vector<1x1xf32> to vector<32x128xf32>
    %115 = arith.mulf %1, %114 : vector<32x128xf32>
    %c1_45 = arith.constant 1 : index
    %c2_46 = arith.constant 2 : index
    %116 = memref.load %arg1[%c1_45, %c2_46] : memref<2x3xf32, #tpu.memory_space<smem>>
    %117 = vector.broadcast %116 : f32 to vector<1x1xf32>
    %118 = arith.mulf %117, %52 : vector<1x1xf32>
    %cst_47 = arith.constant 0.000000e+00 : f32
    %119 = vector.broadcast %cst_47 : f32 to vector<1x1xf32>
    %120 = arith.subf %119, %37 : vector<1x1xf32>
    %121 = arith.mulf %120, %118 : vector<1x1xf32>
    %122 = arith.addf %113, %121 : vector<1x1xf32>
    %123 = vector.broadcast %118 : vector<1x1xf32> to vector<32x128xf32>
    %124 = arith.mulf %3, %123 : vector<32x128xf32>
    %125 = arith.addf %115, %124 : vector<32x128xf32>
    %126 = vector.broadcast %122 : vector<1x1xf32> to vector<32x128xf32>
    %127 = arith.addf %125, %126 : vector<32x128xf32>
    %c0_48 = arith.constant 0 : index
    %c2_49 = arith.constant 2 : index
    %c0_50 = arith.constant 0 : index
    %c0_51 = arith.constant 0 : index
    %128 = vector.load %arg3[%c0_48, %c2_49, %c0_50, %c0_51] : memref<1x3x32x128xf32, #tpu.memory_space<vmem>>, vector<1x1x32x128xf32>
    %129 = vector.shape_cast %128 : vector<1x1x32x128xf32> to vector<32x128xf32>
    %130 = vector.shape_cast %127 : vector<32x128xf32> to vector<1x1x32x128xf32>
    tpu.vector_store %arg3[%c0_48, %c2_49, %c0_50, %c0_51], %130 {strides = array<i32>} : memref<1x3x32x128xf32, #tpu.memory_space<vmem>>, vector<1x1x32x128xf32>,
    %131 = vector.shape_cast %127 : vector<32x128xf32> to vector<1x32x128xf32>
    %cst_52 = arith.constant dense<0x7F800000> : vector<1xf32>
    %132 = vector.multi_reduction <minimumf>, %131, %cst_52 [1, 2] : vector<1x32x128xf32> to vector<1xf32>
    %133 = vector.shape_cast %132 : vector<1xf32> to vector<1x1x1xf32>
    %134 = vector.extract %133[0, 0, 0] : f32 from vector<1x1x1xf32>
    %135 = vector.broadcast %134 : f32 to vector<1x1xf32>
    %136 = vector.shape_cast %127 : vector<32x128xf32> to vector<1x32x128xf32>
    %cst_53 = arith.constant dense<0xFF800000> : vector<1xf32>
    %137 = vector.multi_reduction <maximumf>, %136, %cst_53 [1, 2] : vector<1x32x128xf32> to vector<1xf32>
    %138 = vector.shape_cast %137 : vector<1xf32> to vector<1x1x1xf32>
    %139 = vector.extract %138[0, 0, 0] : f32 from vector<1x1x1xf32>
    %140 = vector.broadcast %139 : f32 to vector<1x1xf32>
    %141 = arith.subf %140, %135 : vector<1x1xf32>
    %cst_54 = arith.constant 9.99999997E-7 : f32
    %142 = vector.broadcast %cst_54 : f32 to vector<1x1xf32>
    %143 = arith.addf %141, %142 : vector<1x1xf32>
    %cst_55 = arith.constant 1.000000e+00 : f32
    %144 = vector.broadcast %cst_55 : f32 to vector<1x1xf32>
    %145 = arith.divf %144, %143 : vector<1x1xf32>
    %146 = vector.broadcast %135 : vector<1x1xf32> to vector<32x128xf32>
    %147 = arith.subf %127, %146 : vector<32x128xf32>
    %148 = vector.broadcast %145 : vector<1x1xf32> to vector<32x128xf32>
    %149 = arith.mulf %147, %148 : vector<32x128xf32>
    %cst_56 = arith.constant 8.000000e+00 : f32
    %150 = vector.broadcast %cst_56 : f32 to vector<32x128xf32>
    %151 = arith.mulf %149, %150 : vector<32x128xf32>
    %152 = arith.fptosi %151 : vector<32x128xf32> to vector<32x128xi32>
    %c0_i32 = arith.constant 0 : i32
    %c7_i32 = arith.constant 7 : i32
    %153 = vector.broadcast %c0_i32 : i32 to vector<32x128xi32>
    %154 = arith.maxsi %153, %152 : vector<32x128xi32>
    %155 = vector.broadcast %c7_i32 : i32 to vector<32x128xi32>
    %156 = arith.minsi %155, %154 : vector<32x128xi32>
    %157 = arith.trunci %156 : vector<32x128xi32> to vector<32x128xi8>
    %c0_57 = arith.constant 0 : index
    %c0_58 = arith.constant 0 : index
    %c0_59 = arith.constant 0 : index
    %158 = vector.load %arg4[%c0_57, %c0_58, %c0_59] : memref<1x32x128xi8, #tpu.memory_space<vmem>>, vector<1x32x128xi8>
    %159 = vector.shape_cast %158 : vector<1x32x128xi8> to vector<32x128xi8>
    %160 = vector.shape_cast %157 : vector<32x128xi8> to vector<1x32x128xi8>
    tpu.vector_store %arg4[%c0_57, %c0_58, %c0_59], %160 {strides = array<i32>} : memref<1x32x128xi8, #tpu.memory_space<vmem>>, vector<1x32x128xi8>,
    %c32_i32 = arith.constant 32 : i32
    %161 = vector.broadcast %c32_i32 : i32 to vector<1x128xi32>
    %c0_i32_60 = arith.constant 0 : i32
    %162 = vector.broadcast %c0_i32_60 : i32 to vector<32x128xi32>
    %163 = arith.cmpi eq, %156, %162 : vector<32x128xi32>
    %164 = arith.extui %163 : vector<32x128xi1> to vector<32x128xi32>
    %cst_61 = arith.constant dense<0> : vector<128xi32>
    %165 = vector.multi_reduction <add>, %164, %cst_61 [0] : vector<32x128xi32> to vector<128xi32>
    %166 = vector.shape_cast %165 : vector<128xi32> to vector<1x128xi32>
    %c0_62 = arith.constant 0 : index
    %c0_63 = arith.constant 0 : index
    %c0_64 = arith.constant 0 : index
    %167 = vector.load %arg6[%c0_62, %c0_63, %c0_64] : memref<1x8x128xi32, #tpu.memory_space<vmem>>, vector<1x1x128xi32>
    %168 = vector.shape_cast %167 : vector<1x1x128xi32> to vector<1x128xi32>
    %169 = vector.shape_cast %166 : vector<1x128xi32> to vector<1x1x128xi32>
    tpu.vector_store %arg6[%c0_62, %c0_63, %c0_64], %169 {strides = array<i32>} : memref<1x8x128xi32, #tpu.memory_space<vmem>>, vector<1x1x128xi32>,
    %170 = arith.subi %161, %166 : vector<1x128xi32>
    %c1_i32 = arith.constant 1 : i32
    %171 = vector.broadcast %c1_i32 : i32 to vector<32x128xi32>
    %172 = arith.cmpi eq, %156, %171 : vector<32x128xi32>
    %173 = arith.extui %172 : vector<32x128xi1> to vector<32x128xi32>
    %cst_65 = arith.constant dense<0> : vector<128xi32>
    %174 = vector.multi_reduction <add>, %173, %cst_65 [0] : vector<32x128xi32> to vector<128xi32>
    %175 = vector.shape_cast %174 : vector<128xi32> to vector<1x128xi32>
    %c0_66 = arith.constant 0 : index
    %c1_67 = arith.constant 1 : index
    %c0_68 = arith.constant 0 : index
    %176 = vector.load %arg6[%c0_66, %c1_67, %c0_68] : memref<1x8x128xi32, #tpu.memory_space<vmem>>, vector<1x1x128xi32>
    %177 = vector.shape_cast %176 : vector<1x1x128xi32> to vector<1x128xi32>
    %178 = vector.shape_cast %175 : vector<1x128xi32> to vector<1x1x128xi32>
    tpu.vector_store %arg6[%c0_66, %c1_67, %c0_68], %178 {strides = array<i32>} : memref<1x8x128xi32, #tpu.memory_space<vmem>>, vector<1x1x128xi32>,
    %179 = arith.subi %170, %175 : vector<1x128xi32>
    %c2_i32 = arith.constant 2 : i32
    %180 = vector.broadcast %c2_i32 : i32 to vector<32x128xi32>
    %181 = arith.cmpi eq, %156, %180 : vector<32x128xi32>
    %182 = arith.extui %181 : vector<32x128xi1> to vector<32x128xi32>
    %cst_69 = arith.constant dense<0> : vector<128xi32>
    %183 = vector.multi_reduction <add>, %182, %cst_69 [0] : vector<32x128xi32> to vector<128xi32>
    %184 = vector.shape_cast %183 : vector<128xi32> to vector<1x128xi32>
    %c0_70 = arith.constant 0 : index
    %c2_71 = arith.constant 2 : index
    %c0_72 = arith.constant 0 : index
    %185 = vector.load %arg6[%c0_70, %c2_71, %c0_72] : memref<1x8x128xi32, #tpu.memory_space<vmem>>, vector<1x1x128xi32>
    %186 = vector.shape_cast %185 : vector<1x1x128xi32> to vector<1x128xi32>
    %187 = vector.shape_cast %184 : vector<1x128xi32> to vector<1x1x128xi32>
    tpu.vector_store %arg6[%c0_70, %c2_71, %c0_72], %187 {strides = array<i32>} : memref<1x8x128xi32, #tpu.memory_space<vmem>>, vector<1x1x128xi32>,
    %188 = arith.subi %179, %184 : vector<1x128xi32>
    %c3_i32 = arith.constant 3 : i32
    %189 = vector.broadcast %c3_i32 : i32 to vector<32x128xi32>
    %190 = arith.cmpi eq, %156, %189 : vector<32x128xi32>
    %191 = arith.extui %190 : vector<32x128xi1> to vector<32x128xi32>
    %cst_73 = arith.constant dense<0> : vector<128xi32>
    %192 = vector.multi_reduction <add>, %191, %cst_73 [0] : vector<32x128xi32> to vector<128xi32>
    %193 = vector.shape_cast %192 : vector<128xi32> to vector<1x128xi32>
    %c0_74 = arith.constant 0 : index
    %c3 = arith.constant 3 : index
    %c0_75 = arith.constant 0 : index
    %194 = vector.load %arg6[%c0_74, %c3, %c0_75] : memref<1x8x128xi32, #tpu.memory_space<vmem>>, vector<1x1x128xi32>
    %195 = vector.shape_cast %194 : vector<1x1x128xi32> to vector<1x128xi32>
    %196 = vector.shape_cast %193 : vector<1x128xi32> to vector<1x1x128xi32>
    tpu.vector_store %arg6[%c0_74, %c3, %c0_75], %196 {strides = array<i32>} : memref<1x8x128xi32, #tpu.memory_space<vmem>>, vector<1x1x128xi32>,
    %197 = arith.subi %188, %193 : vector<1x128xi32>
    %c4_i32 = arith.constant 4 : i32
    %198 = vector.broadcast %c4_i32 : i32 to vector<32x128xi32>
    %199 = arith.cmpi eq, %156, %198 : vector<32x128xi32>
    %200 = arith.extui %199 : vector<32x128xi1> to vector<32x128xi32>
    %cst_76 = arith.constant dense<0> : vector<128xi32>
    %201 = vector.multi_reduction <add>, %200, %cst_76 [0] : vector<32x128xi32> to vector<128xi32>
    %202 = vector.shape_cast %201 : vector<128xi32> to vector<1x128xi32>
    %c0_77 = arith.constant 0 : index
    %c4 = arith.constant 4 : index
    %c0_78 = arith.constant 0 : index
    %203 = vector.load %arg6[%c0_77, %c4, %c0_78] : memref<1x8x128xi32, #tpu.memory_space<vmem>>, vector<1x1x128xi32>
    %204 = vector.shape_cast %203 : vector<1x1x128xi32> to vector<1x128xi32>
    %205 = vector.shape_cast %202 : vector<1x128xi32> to vector<1x1x128xi32>
    tpu.vector_store %arg6[%c0_77, %c4, %c0_78], %205 {strides = array<i32>} : memref<1x8x128xi32, #tpu.memory_space<vmem>>, vector<1x1x128xi32>,
    %206 = arith.subi %197, %202 : vector<1x128xi32>
    %c5_i32 = arith.constant 5 : i32
    %207 = vector.broadcast %c5_i32 : i32 to vector<32x128xi32>
    %208 = arith.cmpi eq, %156, %207 : vector<32x128xi32>
    %209 = arith.extui %208 : vector<32x128xi1> to vector<32x128xi32>
    %cst_79 = arith.constant dense<0> : vector<128xi32>
    %210 = vector.multi_reduction <add>, %209, %cst_79 [0] : vector<32x128xi32> to vector<128xi32>
    %211 = vector.shape_cast %210 : vector<128xi32> to vector<1x128xi32>
    %c0_80 = arith.constant 0 : index
    %c5 = arith.constant 5 : index
    %c0_81 = arith.constant 0 : index
    %212 = vector.load %arg6[%c0_80, %c5, %c0_81] : memref<1x8x128xi32, #tpu.memory_space<vmem>>, vector<1x1x128xi32>
    %213 = vector.shape_cast %212 : vector<1x1x128xi32> to vector<1x128xi32>
    %214 = vector.shape_cast %211 : vector<1x128xi32> to vector<1x1x128xi32>
    tpu.vector_store %arg6[%c0_80, %c5, %c0_81], %214 {strides = array<i32>} : memref<1x8x128xi32, #tpu.memory_space<vmem>>, vector<1x1x128xi32>,
    %215 = arith.subi %206, %211 : vector<1x128xi32>
    %c6_i32 = arith.constant 6 : i32
    %216 = vector.broadcast %c6_i32 : i32 to vector<32x128xi32>
    %217 = arith.cmpi eq, %156, %216 : vector<32x128xi32>
    %218 = arith.extui %217 : vector<32x128xi1> to vector<32x128xi32>
    %cst_82 = arith.constant dense<0> : vector<128xi32>
    %219 = vector.multi_reduction <add>, %218, %cst_82 [0] : vector<32x128xi32> to vector<128xi32>
    %220 = vector.shape_cast %219 : vector<128xi32> to vector<1x128xi32>
    %c0_83 = arith.constant 0 : index
    %c6 = arith.constant 6 : index
    %c0_84 = arith.constant 0 : index
    %221 = vector.load %arg6[%c0_83, %c6, %c0_84] : memref<1x8x128xi32, #tpu.memory_space<vmem>>, vector<1x1x128xi32>
    %222 = vector.shape_cast %221 : vector<1x1x128xi32> to vector<1x128xi32>
    %223 = vector.shape_cast %220 : vector<1x128xi32> to vector<1x1x128xi32>
    tpu.vector_store %arg6[%c0_83, %c6, %c0_84], %223 {strides = array<i32>} : memref<1x8x128xi32, #tpu.memory_space<vmem>>, vector<1x1x128xi32>,
    %224 = arith.subi %215, %220 : vector<1x128xi32>
    %c0_85 = arith.constant 0 : index
    %c7 = arith.constant 7 : index
    %c0_86 = arith.constant 0 : index
    %225 = vector.load %arg6[%c0_85, %c7, %c0_86] : memref<1x8x128xi32, #tpu.memory_space<vmem>>, vector<1x1x128xi32>
    %226 = vector.shape_cast %225 : vector<1x1x128xi32> to vector<1x128xi32>
    %227 = vector.shape_cast %224 : vector<1x128xi32> to vector<1x1x128xi32>
    tpu.vector_store %arg6[%c0_85, %c7, %c0_86], %227 {strides = array<i32>} : memref<1x8x128xi32, #tpu.memory_space<vmem>>, vector<1x1x128xi32>,
    return
  }
  func.func @transform_0(%arg0: i32) -> (i32, i32) {
    %c0_i32 = arith.constant 0 : i32
    %c0_i32_0 = arith.constant 0 : i32
    %c0_i32_1 = arith.constant 0 : i32
    return %c0_i32, %c0_i32_0 : i32, i32
  }
  func.func @transform_1(%arg0: i32) -> (i32, i32, i32, i32) {
    %c0_i32 = arith.constant 0 : i32
    %c0_i32_0 = arith.constant 0 : i32
    %c0_i32_1 = arith.constant 0 : i32
    %c0_i32_2 = arith.constant 0 : i32
    return %arg0, %c0_i32, %c0_i32_0, %c0_i32_1 : i32, i32, i32, i32
  }
  func.func @transform_2(%arg0: i32) -> (i32, i32, i32, i32) {
    %c0_i32 = arith.constant 0 : i32
    %c0_i32_0 = arith.constant 0 : i32
    %c0_i32_1 = arith.constant 0 : i32
    %c0_i32_2 = arith.constant 0 : i32
    return %arg0, %c0_i32, %c0_i32_0, %c0_i32_1 : i32, i32, i32, i32
  }
  func.func @transform_3(%arg0: i32) -> (i32, i32, i32) {
    %c0_i32 = arith.constant 0 : i32
    %c0_i32_0 = arith.constant 0 : i32
    %c0_i32_1 = arith.constant 0 : i32
    return %arg0, %c0_i32, %c0_i32_0 : i32, i32, i32
  }
  func.func @transform_4(%arg0: i32) -> (i32, i32, i32) {
    %c0_i32 = arith.constant 0 : i32
    %c0_i32_0 = arith.constant 0 : i32
    %c0_i32_1 = arith.constant 0 : i32
    return %arg0, %c0_i32, %c0_i32_0 : i32, i32, i32
  }
  func.func @transform_5(%arg0: i32) -> (i32, i32, i32) {
    %c0_i32 = arith.constant 0 : i32
    %c0_i32_0 = arith.constant 0 : i32
    %c0_i32_1 = arith.constant 0 : i32
    return %arg0, %c0_i32, %c0_i32_0 : i32, i32, i32
  }
}

module attributes {stable_mosaic.version = 11 : i64} {
  func.func @style_kernel(%arg0: i32, %arg1: memref<2x2xf32, #tpu.memory_space<smem>>, %arg2: memref<2x256xf32, #tpu.memory_space<vmem>>, %arg3: memref<1x1x256xf32, #tpu.memory_space<vmem>>) attributes {dimension_semantics = [#tpu.dimension_semantics<parallel>], iteration_bounds = array<i64: 2>, scalar_prefetch = 0 : i64, scratch_operands = 0 : i64, tpu.core_type = #tpu.core_type<tc>, window_params = [{transform_indices = @transform_0, window_bounds = array<i64: 2, 2>}, {pipeline_mode = #tpu.pipeline_mode<synchronous>, transform_indices = @transform_1, window_bounds = array<i64: 2, 256>}, {transform_indices = @transform_2, window_bounds = array<i64: 1, 1, 256>}]} {
    %c0 = arith.constant 0 : index
    %c0_0 = arith.constant 0 : index
    %0 = vector.load %arg2[%c0, %c0_0] : memref<2x256xf32, #tpu.memory_space<vmem>>, vector<1x256xf32>
    %1 = arith.index_cast %arg0 : i32 to index
    %c0_1 = arith.constant 0 : index
    %2 = memref.load %arg1[%1, %c0_1] : memref<2x2xf32, #tpu.memory_space<smem>>
    %3 = vector.broadcast %2 : f32 to vector<1x256xf32>
    %4 = arith.mulf %0, %3 : vector<1x256xf32>
    %c1 = arith.constant 1 : index
    %c0_2 = arith.constant 0 : index
    %5 = vector.load %arg2[%c1, %c0_2] : memref<2x256xf32, #tpu.memory_space<vmem>>, vector<1x256xf32>
    %6 = arith.index_cast %arg0 : i32 to index
    %c1_3 = arith.constant 1 : index
    %7 = memref.load %arg1[%6, %c1_3] : memref<2x2xf32, #tpu.memory_space<smem>>
    %8 = vector.broadcast %7 : f32 to vector<1x256xf32>
    %9 = arith.mulf %5, %8 : vector<1x256xf32>
    %10 = arith.addf %4, %9 : vector<1x256xf32>
    %11 = arith.mulf %10, %10 : vector<1x256xf32>
    %12 = vector.shape_cast %11 : vector<1x256xf32> to vector<1x1x256xf32>
    %cst = arith.constant dense<0.000000e+00> : vector<1xf32>
    %13 = vector.multi_reduction <add>, %12, %cst [1, 2] : vector<1x1x256xf32> to vector<1xf32>
    %14 = vector.shape_cast %13 : vector<1xf32> to vector<1x1x1xf32>
    %15 = vector.extract %14[0, 0, 0] : f32 from vector<1x1x1xf32>
    %16 = vector.broadcast %15 : f32 to vector<1x1xf32>
    %cst_4 = arith.constant 9.99999996E-13 : f32
    %17 = vector.broadcast %cst_4 : f32 to vector<1x1xf32>
    %18 = arith.addf %16, %17 : vector<1x1xf32>
    %19 = math.rsqrt %18 : vector<1x1xf32>
    %20 = vector.broadcast %19 : vector<1x1xf32> to vector<1x256xf32>
    %21 = arith.mulf %10, %20 : vector<1x256xf32>
    %c0_5 = arith.constant 0 : index
    %c0_6 = arith.constant 0 : index
    %c0_7 = arith.constant 0 : index
    %22 = vector.load %arg3[%c0_5, %c0_6, %c0_7] : memref<1x1x256xf32, #tpu.memory_space<vmem>>, vector<1x1x256xf32>
    %23 = vector.shape_cast %22 : vector<1x1x256xf32> to vector<1x256xf32>
    %24 = vector.shape_cast %21 : vector<1x256xf32> to vector<1x1x256xf32>
    tpu.vector_store %arg3[%c0_5, %c0_6, %c0_7], %24 {strides = array<i32>} : memref<1x1x256xf32, #tpu.memory_space<vmem>>, vector<1x1x256xf32>,
    return
  }
  func.func @transform_0(%arg0: i32) -> (i32, i32) {
    %c0_i32 = arith.constant 0 : i32
    %c0_i32_0 = arith.constant 0 : i32
    %c0_i32_1 = arith.constant 0 : i32
    return %c0_i32, %c0_i32_0 : i32, i32
  }
  func.func @transform_1(%arg0: i32) -> (i32, i32) {
    %c0_i32 = arith.constant 0 : i32
    %c0_i32_0 = arith.constant 0 : i32
    %c0_i32_1 = arith.constant 0 : i32
    return %c0_i32, %c0_i32_0 : i32, i32
  }
  func.func @transform_2(%arg0: i32) -> (i32, i32, i32) {
    %c0_i32 = arith.constant 0 : i32
    %c0_i32_0 = arith.constant 0 : i32
    %c0_i32_1 = arith.constant 0 : i32
    return %arg0, %c0_i32, %c0_i32_0 : i32, i32, i32
  }
}

</mosaic_0001>

<llo_original>
// kernel: my_cellpose_forward.3
$region0: #{my_cellpose_forward.3}
  #allocation0 [shape = 'u32[]', space=smem, size = 0x4, offset = 0x4, fixed_abs, tag = 'smem constant byte address 0x4 - core index']
  #allocation1 [shape = 'u32[72,128]{1,0:T(1,128)}', space=vmem, size = 0x9000, scoped, tag = 'internal scratch']
  %s0 = inlined_call_operand.vmem [shape: f32[2,2], index: 0, kind: input, shape index: {}]
  %s1 = inlined_call_operand.vmem [shape: f32[2,256], index: 1, kind: input, shape index: {}]
  %s2 = inlined_call_operand.vmem [shape: f32[2,1,256], index: 2, kind: output, shape index: {}]
  %s3 = sld [smem:[#allocation0]]
  $region45: #{my_cellpose_forward.3} parent=0
    _
  %s5 = ssub.s32 1, %s3
  %s6 = scalar_select 0, %s5, %s3
  $region1: #{my_cellpose_forward.3} parent=0
    #allocation2 [shape = 'u8[1024]{0}', space=smem, size = 0x400, scoped, tag = 'input window, operand 0, single buffered']
    #allocation3 [shape = 's32[2]{0}', space=sflag, size = 0x8, scoped, tag = 'scoped memory for my_cellpose_forward.3']
    %7 = vsyncpa [#allocation3], 0
    loop: start=0, step=1, limit=4
    $region2: #{my_cellpose_forward.3} parent=1 // loop_pre_header
      _
    $region3: #{my_cellpose_forward.3} parent=1 // loop_header
      %s9 = sphi 0, %s13
      %p10 = scmp.ge.s32.totalorder %s9, 4
      %s17 = sphi 0, %s17
      %s19 = sphi 0, %s17
      %s20 = sphi 0, %s19
      %s34 = sphi 0, %s20
      %s38 = sphi 0, %s38
      %s40 = sphi 0, %s38
      %s41 = sphi 0, %s40
      %s55 = sphi 0, %s41
      %s61 = sphi 0, %s63
      %s64 = sphi 0, %s61
      %s65 = sphi 0, %s64
      %s81 = sphi 0, %s65
    $region4: #{my_cellpose_forward.3} parent=1 // loop_header_branch
      %12 = sbr.rel (%p10) target = $region8
    $region5: #{my_cellpose_forward.3} parent=1 // loop_body
      %s14 = ssub.s32 %s9, 1
      %s15 = ssub.s32 %s9, 2
      %s16 = sadd.s32 %s9, 1
      %s18 = sadd.s32 %s17, 1
      %p21 = scmp.eq.s32.totalorder %s9, 1
      %p22 = scmp.ne.s32.totalorder %s17, %s19
      %p23 = scmp.eq.s32.totalorder %s9, 0
      %p24 = por %p22, %p23
      %p25 = scmp.ne.s32.totalorder %s17, %s19
      %p26 = scmp.eq.s32.totalorder %s14, 1
      %p27 = por %p25, %p26
      %p28 = scmp.ne.s32.totalorder %s19, %s20
      %p29 = scmp.eq.s32.totalorder %s14, 0
      %p30 = por %p28, %p29
      %p31 = scmp.ne.s32.totalorder %s19, %s20
      %p32 = scmp.eq.s32.totalorder %s15, 1
      %p33 = por %p31, %p32
      %p35 = scmp.ne.s32.totalorder %s20, %s34
      %p36 = scmp.eq.s32.totalorder %s15, 0
      %p37 = por %p35, %p36
      %s39 = sadd.s32 %s38, 1
      %p42 = scmp.eq.s32.totalorder %s9, 1
      %p43 = scmp.ne.s32.totalorder %s38, %s40
      %p44 = scmp.eq.s32.totalorder %s9, 0
      %p45 = por %p43, %p44
      %p46 = scmp.ne.s32.totalorder %s38, %s40
      %p47 = scmp.eq.s32.totalorder %s14, 1
      %p48 = por %p46, %p47
      %p49 = scmp.ne.s32.totalorder %s40, %s41
      %p50 = scmp.eq.s32.totalorder %s14, 0
      %p51 = por %p49, %p50
      %p52 = scmp.ne.s32.totalorder %s40, %s41
      %p53 = scmp.eq.s32.totalorder %s15, 1
      %p54 = por %p52, %p53
      %p56 = scmp.ne.s32.totalorder %s41, %s55
      %p57 = scmp.eq.s32.totalorder %s15, 0
      %p58 = por %p56, %p57
      %s59 = ssub.s32 %s9, %s16
      %p60 = scmp.eq.s32.totalorder %s59, 0
      %s62 = sadd.s32 %s61, 1
      %s63 = scalar_select %p60, %s61, %s62
      %p66 = pneg %p60
      %p67 = scmp.eq.s32.totalorder %s9, 1
      %p68 = por %p66, %p67
      %p69 = scmp.ne.s32.totalorder %s61, %s64
      %p70 = scmp.eq.s32.totalorder %s9, 0
      %p71 = por %p69, %p70
      %p72 = scmp.ne.s32.totalorder %s61, %s64
      %p73 = scmp.eq.s32.totalorder %s14, 1
      %p74 = por %p72, %p73
      %p75 = scmp.ne.s32.totalorder %s64, %s65
      %p76 = scmp.eq.s32.totalorder %s14, 0
      %p77 = por %p75, %p76
      %p78 = scmp.ne.s32.totalorder %s64, %s65
      %p79 = scmp.eq.s32.totalorder %s15, 1
      %p80 = por %p78, %p79
      %p82 = scmp.ne.s32.totalorder %s65, %s81
      %p83 = scmp.eq.s32.totalorder %s15, 0
      %p84 = por %p82, %p83
      %p85 = scmp.le.s32.totalorder 1, %s9
      %p86 = scmp.lt.s32.totalorder %s9, 3
      %p87 = pnand %p85, %p86
      %p88 = pneg %p87
      // Predicated region
      $region9: #{my_cellpose_forward.3} parent=5 // pred_check
        _
      $region10: #{my_cellpose_forward.3} parent=5 // pred_check_branch
        %90 = sbr.rel (%p87) target = $region12
      $region11: #{my_cellpose_forward.3} parent=5 // pred_region
        %s91 = ssub.s32 %s9, 1
        // Predicated region
        $region13: #{my_cellpose_forward.3} parent=11 // pred_check
          %p92 = pneg %p30
        $region14: #{my_cellpose_forward.3} parent=11 // pred_check_branch
          %94 = sbr.rel (%p92) target = $region16
        $region15: #{my_cellpose_forward.3} parent=11 // pred_region
          %96 = vsyncadd [#allocation3], 0
          %s98 = sshll.u32 %s0, 4
          %s99 = int_to_ptr.vmem [resolvable:$true] %s98
          %101 = dma.vmem_to_smem %s99, 32, [#allocation2], [#allocation3]
        $region16: #{my_cellpose_forward.3} parent=11 // pred_fallthru
          _
        // Predicated region
        $region17: #{my_cellpose_forward.3} parent=11 // pred_check
          %p102 = pneg %p51
        $region18: #{my_cellpose_forward.3} parent=11 // pred_check_branch
          %104 = sbr.rel (%p102) target = $region20
        $region19: #{my_cellpose_forward.3} parent=11 // pred_region
          _
        $region20: #{my_cellpose_forward.3} parent=11 // pred_fallthru
          _
      $region12: #{my_cellpose_forward.3} parent=5 // pred_fallthru
        _
      %p105 = scmp.lt.s32.totalorder %s9, 2
      // Predicated region
      $region21: #{my_cellpose_forward.3} parent=5 // pred_check
        %p106 = pneg %p105
      $region22: #{my_cellpose_forward.3} parent=5 // pred_check_branch
        %108 = sbr.rel (%p106) target = $region24
      $region23: #{my_cellpose_forward.3} parent=5 // pred_region
        _
      $region24: #{my_cellpose_forward.3} parent=5 // pred_fallthru
        _
      %p109 = scmp.le.s32.totalorder 1, %s9
      %p110 = scmp.lt.s32.totalorder %s9, 3
      %p111 = pnand %p109, %p110
      %p112 = pneg %p111
      // Predicated region
      $region25: #{my_cellpose_forward.3} parent=5 // pred_check
        _
      $region26: #{my_cellpose_forward.3} parent=5 // pred_check_branch
        %114 = sbr.rel (%p111) target = $region28
      $region27: #{my_cellpose_forward.3} parent=5 // pred_region
        %s115 = ssub.s32 %s9, 1
        // Predicated region
        $region29: #{my_cellpose_forward.3} parent=27 // pred_check
          %p116 = pneg %p30
        $region30: #{my_cellpose_forward.3} parent=27 // pred_check_branch
          %118 = sbr.rel (%p116) target = $region32
        $region31: #{my_cellpose_forward.3} parent=27 // pred_region
          %120 = dma.done [#allocation3], 32
        $region32: #{my_cellpose_forward.3} parent=27 // pred_fallthru
          _
        %121 = sfence
        %p122 = pneg %p30
        %p123 = pneg %p27
        %p124 = pneg %p51
        %p125 = pneg %p48
        %p126 = pneg %p77
        %p127 = pneg %p74
        %p128 = scmp.lt.s32.totalorder %s14, 1
        %s129 = scalar_select %p128, %s14, 1
        %s130 = smul.addr %s129, 2
        %s131 = scalar_lea.vmem %s2, %s130
        %p132 = scmp.lt.s32.totalorder %s14, 1
        %s133 = scalar_select %p132, %s14, 1
        %s134 = smul.addr %s133, 2
        %s135 = scalar_lea.vmem %s2, %s134
        %v136 = vld [vmem:[%s1] ss:$2 sm:$0x3]
        %s137 = smul.u32 %s14, 128
        %s138 = sld [smem:[#allocation2 + %s137]]
        %v139 = vstv %s138
        %v140 = vmul.f32 %v136, %v139
        %s141 = scalar_lea.vmem %s1, 1
        %v142 = vld [vmem:[%s141] ss:$2 sm:$0x3]
        %s143 = sadd.s32 %s137, 1
        %s144 = sld [smem:[#allocation2 + %s143]]
        %v145 = vstv %s144
        %v146 = vmul.f32 %v142, %v145
        %v147 = vadd.f32 %v140, %v146
        %v148 = vmul.f32 %v147, %v147
        %v150 = vperm.slane %v148, 0
        %v151 = vperm.slane %v148, 1
        %vm154 = vcmask 1040384
        %v155 = vsel %vm154, %v150, 0.0
        %v156 = vsel %vm154, %v151, 0.0
        %v157 = vadd.f32 %v155, %v156
        %158 = vadd.xlane.f32.xlu0 %v157
        %v159 = vpop.xlane.xlu0 %158
        %v160 = vrot.slane %v159, 4
        %v161 = vadd.f32 %v159, %v160
        %v162 = vrot.slane %v161, 2
        %v163 = vadd.f32 %v161, %v162
        %v164 = vrot.slane %v163, 1
        %v165 = vadd.f32 %v163, %v164
        %s166 = vtos %v165
        %v167 = vstv %s166
        %v168 = vadd.f32 %v167, 1e-12
        %v169 = vrsqrt.pop %v168
        %v170 = vmul.f32 %v169, %v168
        %v171 = vmul.f32 %v170, %v169
        %v172 = vmul.f32 0.5, %v171
        %v173 = vsub.f32 1.5, %v172
        %v174 = vmul.f32 %v169, %v173
        %vm175 = vweird.f32 %v168
        %vm176 = vweird.f32 %v169
        %vm177 = vmor %vm175, %vm176
        %v178 = vsel %vm177, %v169, %v174
        %v179 = vmul.f32 %v147, %v178
        %v180 = vlaneseq
        %vm181 = vcmp.ge.s32.totalorder %v180, 0
        %vm182 = vcmp.lt.s32.totalorder %v180, 256
        %vm183 = vmand %vm181, %vm182
        %184 = vst.msk [vmem:[%s135] sm:$0x3] %vm183, %v179
        %p185 = scmp.lt.s32.totalorder %s14, 1
        %s186 = scalar_select %p185, %s14, 1
        %s187 = smul.addr %s186, 2
        %s188 = scalar_lea.vmem %s2, %s187
        // Predicated region
        $region33: #{my_cellpose_forward.3} parent=27 // pred_check
          %p189 = pneg %p74
        $region34: #{my_cellpose_forward.3} parent=27 // pred_check_branch
          %191 = sbr.rel (%p189) target = $region36
        $region35: #{my_cellpose_forward.3} parent=27 // pred_region
          _
        $region36: #{my_cellpose_forward.3} parent=27 // pred_fallthru
          _
      $region28: #{my_cellpose_forward.3} parent=5 // pred_fallthru
        _
      %p192 = scmp.le.s32.totalorder 2, %s9
      // Predicated region
      $region37: #{my_cellpose_forward.3} parent=5 // pred_check
        %p193 = pneg %p192
      $region38: #{my_cellpose_forward.3} parent=5 // pred_check_branch
        %195 = sbr.rel (%p193) target = $region40
      $region39: #{my_cellpose_forward.3} parent=5 // pred_region
        %s196 = ssub.s32 %s9, 2
        // Predicated region
        $region41: #{my_cellpose_forward.3} parent=39 // pred_check
          %p197 = pneg %p80
        $region42: #{my_cellpose_forward.3} parent=39 // pred_check_branch
          %199 = sbr.rel (%p197) target = $region44
        $region43: #{my_cellpose_forward.3} parent=39 // pred_region
          %p200 = scmp.lt.s32.totalorder %s15, 1
          %s201 = scalar_select %p200, %s15, 1
          %s202 = smul.addr %s201, 2
          %s203 = scalar_lea.vmem %s2, %s202
        $region44: #{my_cellpose_forward.3} parent=39 // pred_fallthru
          _
      $region40: #{my_cellpose_forward.3} parent=5 // pred_fallthru
        _
    $region6: #{my_cellpose_forward.3} parent=1 // loop_footer
      %s13 = sadd.s32 1, %s9
    $region7: #{my_cellpose_forward.3} parent=1 // loop_footer_branch
      %8 = sbr.rel target = $region3
    $region8: #{my_cellpose_forward.3} parent=1 // loop_exit
      _
    %204 = vsyncpa [#allocation3], 1
    %s205 = scalar_lea.sflag [#allocation3], 1
    %206 = vsyncpa %s205, 1

// kernel: my_cellpose_forward.2
$region0: #{my_cellpose_forward.2}
  #allocation0 [shape = 'u32[]', space=smem, size = 0x4, offset = 0x4, fixed_abs, tag = 'smem constant byte address 0x4 - core index']
  #allocation1 [shape = 'u32[72,128]{1,0:T(1,128)}', space=vmem, size = 0x9000, scoped, tag = 'internal scratch']
  %s0 = inlined_call_operand.vmem [shape: f32[2,3], index: 0, kind: input, shape index: {}]
  %s1 = inlined_call_operand.vmem [shape: f32[2,2,32,128], index: 1, kind: input, shape index: {}]
  %s2 = inlined_call_operand.vmem [shape: f32[2,3,32,128], index: 2, kind: output, shape index: {0}]
  %s3 = inlined_call_operand.vmem [shape: s8[2,32,128], index: 3, kind: output, shape index: {1}]
  %s4 = inlined_call_operand.vmem [shape: f32[2,2,128], index: 4, kind: output, shape index: {2}]
  %s5 = inlined_call_operand.vmem [shape: s32[2,8,128], index: 5, kind: output, shape index: {3}]
  %6 = xla_tuple %s2, %s3, %s4, %s5
  %s7 = sld [smem:[#allocation0]]
  $region69: #{my_cellpose_forward.2} parent=0
    _
  %s9 = ssub.s32 1, %s7
  %s10 = scalar_select 0, %s9, %s7
  $region1: #{my_cellpose_forward.2} parent=0
    #allocation2 [shape = 'u8[1024]{0}', space=smem, size = 0x400, scoped, tag = 'input window, operand 0, single buffered']
    #allocation3 [shape = 's32[2]{0}', space=sflag, size = 0x8, scoped, tag = 'scoped memory for my_cellpose_forward.2']
    %11 = vsyncpa [#allocation3], 0
    loop: start=0, step=1, limit=4
    $region2: #{my_cellpose_forward.2} parent=1 // loop_pre_header
      _
    $region3: #{my_cellpose_forward.2} parent=1 // loop_header
      %s13 = sphi 0, %s17
      %p14 = scmp.ge.s32.totalorder %s13, 4
      %s21 = sphi 0, %s21
      %s23 = sphi 0, %s21
      %s24 = sphi 0, %s23
      %s38 = sphi 0, %s24
      %s44 = sphi 0, %s46
      %s47 = sphi 0, %s44
      %s48 = sphi 0, %s47
      %s64 = sphi 0, %s48
      %s70 = sphi 0, %s72
      %s73 = sphi 0, %s70
      %s74 = sphi 0, %s73
      %s90 = sphi 0, %s74
      %s96 = sphi 0, %s98
      %s99 = sphi 0, %s96
      %s100 = sphi 0, %s99
      %s116 = sphi 0, %s100
      %s122 = sphi 0, %s124
      %s125 = sphi 0, %s122
      %s126 = sphi 0, %s125
      %s142 = sphi 0, %s126
      %s148 = sphi 0, %s150
      %s151 = sphi 0, %s148
      %s152 = sphi 0, %s151
      %s168 = sphi 0, %s152
    $region4: #{my_cellpose_forward.2} parent=1 // loop_header_branch
      %16 = sbr.rel (%p14) target = $region8
    $region5: #{my_cellpose_forward.2} parent=1 // loop_body
      %s18 = ssub.s32 %s13, 1
      %s19 = ssub.s32 %s13, 2
      %s20 = sadd.s32 %s13, 1
      %s22 = sadd.s32 %s21, 1
      %p25 = scmp.eq.s32.totalorder %s13, 1
      %p26 = scmp.ne.s32.totalorder %s21, %s23
      %p27 = scmp.eq.s32.totalorder %s13, 0
      %p28 = por %p26, %p27
      %p29 = scmp.ne.s32.totalorder %s21, %s23
      %p30 = scmp.eq.s32.totalorder %s18, 1
      %p31 = por %p29, %p30
      %p32 = scmp.ne.s32.totalorder %s23, %s24
      %p33 = scmp.eq.s32.totalorder %s18, 0
      %p34 = por %p32, %p33
      %p35 = scmp.ne.s32.totalorder %s23, %s24
      %p36 = scmp.eq.s32.totalorder %s19, 1
      %p37 = por %p35, %p36
      %p39 = scmp.ne.s32.totalorder %s24, %s38
      %p40 = scmp.eq.s32.totalorder %s19, 0
      %p41 = por %p39, %p40
      %s42 = ssub.s32 %s13, %s20
      %p43 = scmp.eq.s32.totalorder %s42, 0
      %s45 = sadd.s32 %s44, 1
      %s46 = scalar_select %p43, %s44, %s45
      %p49 = pneg %p43
      %p50 = scmp.eq.s32.totalorder %s13, 1
      %p51 = por %p49, %p50
      %p52 = scmp.ne.s32.totalorder %s44, %s47
      %p53 = scmp.eq.s32.totalorder %s13, 0
      %p54 = por %p52, %p53
      %p55 = scmp.ne.s32.totalorder %s44, %s47
      %p56 = scmp.eq.s32.totalorder %s18, 1
      %p57 = por %p55, %p56
      %p58 = scmp.ne.s32.totalorder %s47, %s48
      %p59 = scmp.eq.s32.totalorder %s18, 0
      %p60 = por %p58, %p59
      %p61 = scmp.ne.s32.totalorder %s47, %s48
      %p62 = scmp.eq.s32.totalorder %s19, 1
      %p63 = por %p61, %p62
      %p65 = scmp.ne.s32.totalorder %s48, %s64
      %p66 = scmp.eq.s32.totalorder %s19, 0
      %p67 = por %p65, %p66
      %s68 = ssub.s32 %s13, %s20
      %p69 = scmp.eq.s32.totalorder %s68, 0
      %s71 = sadd.s32 %s70, 1
      %s72 = scalar_select %p69, %s70, %s71
      %p75 = pneg %p69
      %p76 = scmp.eq.s32.totalorder %s13, 1
      %p77 = por %p75, %p76
      %p78 = scmp.ne.s32.totalorder %s70, %s73
      %p79 = scmp.eq.s32.totalorder %s13, 0
      %p80 = por %p78, %p79
      %p81 = scmp.ne.s32.totalorder %s70, %s73
      %p82 = scmp.eq.s32.totalorder %s18, 1
      %p83 = por %p81, %p82
      %p84 = scmp.ne.s32.totalorder %s73, %s74
      %p85 = scmp.eq.s32.totalorder %s18, 0
      %p86 = por %p84, %p85
      %p87 = scmp.ne.s32.totalorder %s73, %s74
      %p88 = scmp.eq.s32.totalorder %s19, 1
      %p89 = por %p87, %p88
      %p91 = scmp.ne.s32.totalorder %s74, %s90
      %p92 = scmp.eq.s32.totalorder %s19, 0
      %p93 = por %p91, %p92
      %s94 = ssub.s32 %s13, %s20
      %p95 = scmp.eq.s32.totalorder %s94, 0
      %s97 = sadd.s32 %s96, 1
      %s98 = scalar_select %p95, %s96, %s97
      %p101 = pneg %p95
      %p102 = scmp.eq.s32.totalorder %s13, 1
      %p103 = por %p101, %p102
      %p104 = scmp.ne.s32.totalorder %s96, %s99
      %p105 = scmp.eq.s32.totalorder %s13, 0
      %p106 = por %p104, %p105
      %p107 = scmp.ne.s32.totalorder %s96, %s99
      %p108 = scmp.eq.s32.totalorder %s18, 1
      %p109 = por %p107, %p108
      %p110 = scmp.ne.s32.totalorder %s99, %s100
      %p111 = scmp.eq.s32.totalorder %s18, 0
      %p112 = por %p110, %p111
      %p113 = scmp.ne.s32.totalorder %s99, %s100
      %p114 = scmp.eq.s32.totalorder %s19, 1
      %p115 = por %p113, %p114
      %p117 = scmp.ne.s32.totalorder %s100, %s116
      %p118 = scmp.eq.s32.totalorder %s19, 0
      %p119 = por %p117, %p118
      %s120 = ssub.s32 %s13, %s20
      %p121 = scmp.eq.s32.totalorder %s120, 0
      %s123 = sadd.s32 %s122, 1
      %s124 = scalar_select %p121, %s122, %s123
      %p127 = pneg %p121
      %p128 = scmp.eq.s32.totalorder %s13, 1
      %p129 = por %p127, %p128
      %p130 = scmp.ne.s32.totalorder %s122, %s125
      %p131 = scmp.eq.s32.totalorder %s13, 0
      %p132 = por %p130, %p131
      %p133 = scmp.ne.s32.totalorder %s122, %s125
      %p134 = scmp.eq.s32.totalorder %s18, 1
      %p135 = por %p133, %p134
      %p136 = scmp.ne.s32.totalorder %s125, %s126
      %p137 = scmp.eq.s32.totalorder %s18, 0
      %p138 = por %p136, %p137
      %p139 = scmp.ne.s32.totalorder %s125, %s126
      %p140 = scmp.eq.s32.totalorder %s19, 1
      %p141 = por %p139, %p140
      %p143 = scmp.ne.s32.totalorder %s126, %s142
      %p144 = scmp.eq.s32.totalorder %s19, 0
      %p145 = por %p143, %p144
      %s146 = ssub.s32 %s13, %s20
      %p147 = scmp.eq.s32.totalorder %s146, 0
      %s149 = sadd.s32 %s148, 1
      %s150 = scalar_select %p147, %s148, %s149
      %p153 = pneg %p147
      %p154 = scmp.eq.s32.totalorder %s13, 1
      %p155 = por %p153, %p154
      %p156 = scmp.ne.s32.totalorder %s148, %s151
      %p157 = scmp.eq.s32.totalorder %s13, 0
      %p158 = por %p156, %p157
      %p159 = scmp.ne.s32.totalorder %s148, %s151
      %p160 = scmp.eq.s32.totalorder %s18, 1
      %p161 = por %p159, %p160
      %p162 = scmp.ne.s32.totalorder %s151, %s152
      %p163 = scmp.eq.s32.totalorder %s18, 0
      %p164 = por %p162, %p163
      %p165 = scmp.ne.s32.totalorder %s151, %s152
      %p166 = scmp.eq.s32.totalorder %s19, 1
      %p167 = por %p165, %p166
      %p169 = scmp.ne.s32.totalorder %s152, %s168
      %p170 = scmp.eq.s32.totalorder %s19, 0
      %p171 = por %p169, %p170
      %p172 = scmp.le.s32.totalorder 1, %s13
      %p173 = scmp.lt.s32.totalorder %s13, 3
      %p174 = pnand %p172, %p173
      %p175 = pneg %p174
      // Predicated region
      $region9: #{my_cellpose_forward.2} parent=5 // pred_check
        _
      $region10: #{my_cellpose_forward.2} parent=5 // pred_check_branch
        %177 = sbr.rel (%p174) target = $region12
      $region11: #{my_cellpose_forward.2} parent=5 // pred_region
        %s178 = ssub.s32 %s13, 1
        // Predicated region
        $region13: #{my_cellpose_forward.2} parent=11 // pred_check
          %p179 = pneg %p34
        $region14: #{my_cellpose_forward.2} parent=11 // pred_check_branch
          %181 = sbr.rel (%p179) target = $region16
        $region15: #{my_cellpose_forward.2} parent=11 // pred_region
          %183 = vsyncadd [#allocation3], 0
          %s185 = sshll.u32 %s0, 4
          %s186 = int_to_ptr.vmem [resolvable:$true] %s185
          %188 = dma.vmem_to_smem %s186, 32, [#allocation2], [#allocation3]
        $region16: #{my_cellpose_forward.2} parent=11 // pred_fallthru
          _
      $region12: #{my_cellpose_forward.2} parent=5 // pred_fallthru
        _
      %p189 = scmp.lt.s32.totalorder %s13, 2
      // Predicated region
      $region17: #{my_cellpose_forward.2} parent=5 // pred_check
        %p190 = pneg %p189
      $region18: #{my_cellpose_forward.2} parent=5 // pred_check_branch
        %192 = sbr.rel (%p190) target = $region20
      $region19: #{my_cellpose_forward.2} parent=5 // pred_region
        // Predicated region
        $region21: #{my_cellpose_forward.2} parent=19 // pred_check
          %p193 = pneg %p54
        $region22: #{my_cellpose_forward.2} parent=19 // pred_check_branch
          %195 = sbr.rel (%p193) target = $region24
        $region23: #{my_cellpose_forward.2} parent=19 // pred_region
          %p196 = scmp.lt.s32.totalorder %s13, 1
          %s197 = scalar_select %p196, %s13, 1
          %s198 = smul.addr %s197, 8
          %s199 = smul.addr %s198, 8
          %s200 = scalar_lea.vmem %s1, %s199
        $region24: #{my_cellpose_forward.2} parent=19 // pred_fallthru
          _
      $region20: #{my_cellpose_forward.2} parent=5 // pred_fallthru
        _
      %p201 = scmp.le.s32.totalorder 1, %s13
      %p202 = scmp.lt.s32.totalorder %s13, 3
      %p203 = pnand %p201, %p202
      %p204 = pneg %p203
      // Predicated region
      $region25: #{my_cellpose_forward.2} parent=5 // pred_check
        _
      $region26: #{my_cellpose_forward.2} parent=5 // pred_check_branch
        %206 = sbr.rel (%p203) target = $region28
      $region27: #{my_cellpose_forward.2} parent=5 // pred_region
        %s207 = ssub.s32 %s13, 1
        // Predicated region
        $region29: #{my_cellpose_forward.2} parent=27 // pred_check
          %p208 = pneg %p34
        $region30: #{my_cellpose_forward.2} parent=27 // pred_check_branch
          %210 = sbr.rel (%p208) target = $region32
        $region31: #{my_cellpose_forward.2} parent=27 // pred_region
          %212 = dma.done [#allocation3], 32
        $region32: #{my_cellpose_forward.2} parent=27 // pred_fallthru
          _
        %213 = sfence
        %p214 = pneg %p34
        %p215 = pneg %p31
        %p216 = scmp.lt.s32.totalorder %s18, 1
        %s217 = scalar_select %p216, %s18, 1
        %s218 = smul.addr %s217, 8
        %s219 = smul.addr %s218, 8
        %s220 = scalar_lea.vmem %s1, %s219
        %p221 = pneg %p60
        %p222 = pneg %p57
        %p223 = pneg %p86
        %p224 = pneg %p83
        %p225 = scmp.lt.s32.totalorder %s18, 1
        %s226 = scalar_select %p225, %s18, 1
        %s227 = smul.addr %s226, 12
        %s228 = smul.addr %s227, 8
        %s229 = scalar_lea.vmem %s2, %s228
        %p230 = pneg %p112
        %p231 = pneg %p109
        %p232 = scmp.lt.s32.totalorder %s18, 1
        %s233 = scalar_select %p232, %s18, 1
        %s234 = smul.addr %s233, 8
        %s235 = scalar_lea.vmem %s3, %s234
        %p236 = pneg %p138
        %p237 = pneg %p135
        %p238 = scmp.lt.s32.totalorder %s18, 1
        %s239 = scalar_select %p238, %s18, 1
        %s240 = smul.addr %s239, 2
        %s241 = scalar_lea.vmem %s4, %s240
        %p242 = pneg %p164
        %p243 = pneg %p161
        %p244 = scmp.lt.s32.totalorder %s18, 1
        %s245 = scalar_select %p244, %s18, 1
        %s246 = smul.addr %s245, 8
        %s247 = scalar_lea.vmem %s5, %s246
        %p248 = scmp.lt.s32.totalorder %s18, 1
        %s249 = scalar_select %p248, %s18, 1
        %s250 = smul.addr %s249, 8
        %s251 = smul.addr %s250, 8
        %s252 = scalar_lea.vmem %s1, %s251
        %p253 = scmp.lt.s32.totalorder %s18, 1
        %s254 = scalar_select %p253, %s18, 1
        %s255 = smul.addr %s254, 12
        %s256 = smul.addr %s255, 8
        %s257 = scalar_lea.vmem %s2, %s256
        %p258 = scmp.lt.s32.totalorder %s18, 1
        %s259 = scalar_select %p258, %s18, 1
        %s260 = smul.addr %s259, 8
        %s261 = scalar_lea.vmem %s3, %s260
        %p262 = scmp.lt.s32.totalorder %s18, 1
        %s263 = scalar_select %p262, %s18, 1
        %s264 = smul.addr %s263, 2
        %s265 = scalar_lea.vmem %s4, %s264
        %p266 = scmp.lt.s32.totalorder %s18, 1
        %s267 = scalar_select %p266, %s18, 1
        %s268 = smul.addr %s267, 8
        %s269 = scalar_lea.vmem %s5, %s268
        %v270 = vld [vmem:[%s252] sm:$0xff]
        %v271 = vld [vmem:[%s252 + $0x8] sm:$0xff]
        %v272 = vld [vmem:[%s252 + $0x10] sm:$0xff]
        %v273 = vld [vmem:[%s252 + $0x18] sm:$0xff]
        %s274 = scalar_lea.vmem %s252, 32
        %v275 = vld [vmem:[%s274] sm:$0xff]
        %v276 = vld [vmem:[%s274 + $0x8] sm:$0xff]
        %v277 = vld [vmem:[%s274 + $0x10] sm:$0xff]
        %v278 = vld [vmem:[%s274 + $0x18] sm:$0xff]
        %v279 = vmin.f32 %v270, %v271
        %v280 = vmin.f32 %v272, %v273
        %v281 = vmin.f32 %v279, %v280
        %282 = vmin.xlane.f32.xlu0 %v281
        %v283 = vpop.xlane.xlu0 %282
        %v284 = vrot.slane %v283, 4
        %v285 = vmin.f32 %v283, %v284
        %v286 = vrot.slane %v285, 2
        %v287 = vmin.f32 %v285, %v286
        %v288 = vrot.slane %v287, 1
        %v289 = vmin.f32 %v287, %v288
        %s290 = vtos %v289
        %v291 = vstv %s290
        %v292 = vmax.f32 %v270, %v271
        %v293 = vmax.f32 %v272, %v273
        %v294 = vmax.f32 %v292, %v293
        %295 = vmax.xlane.f32.xlu0 %v294
        %v296 = vpop.xlane.xlu0 %295
        %v297 = vrot.slane %v296, 4
        %v298 = vmax.f32 %v296, %v297
        %v299 = vrot.slane %v298, 2
        %v300 = vmax.f32 %v298, %v299
        %v301 = vrot.slane %v300, 1
        %v302 = vmax.f32 %v300, %v301
        %s303 = vtos %v302
        %v304 = vstv %s303
        %v305 = vadd.f32 %v270, %v271
        %v306 = vadd.f32 %v305, %v272
        %v307 = vadd.f32 %v306, %v273
        %308 = vadd.xlane.f32.xlu0 %v307
        %v309 = vpop.xlane.xlu0 %308
        %v310 = vrot.slane %v309, 4
        %v311 = vadd.f32 %v309, %v310
        %v312 = vrot.slane %v311, 2
        %v313 = vadd.f32 %v311, %v312
        %v314 = vrot.slane %v313, 1
        %v315 = vadd.f32 %v313, %v314
        %s316 = vtos %v315
        %v317 = vstv %s316
        %v318 = vsub.f32 %v304, %v291
        %v319 = vadd.f32 %v318, 1e-06
        %v320 = vrcp.pop %v319
        %v321 = vmul.f32 %v319, %v320
        %v322 = vsub.f32 1.0, %v321
        %v323 = vmul.f32 %v320, %v322
        %v324 = vadd.f32 %v320, %v323
        %vm325 = vweird.f32 %v319
        %vm326 = vweird.f32 %v320
        %vm327 = vmor %vm325, %vm326
        %v328 = vsel %vm327, %v320, %v324
        %v329 = vand.u32 2147483647, %v319
        %vm330 = vcmp.eq.f32.partialorder %v329, 8.507059e+37
        %v331 = vand.u32 %v319, 2147483648
        %v332 = vor.u32 1.1754944e-38, %v331
        %v333 = vsel %vm330, %v332, %v328
        %v334 = vmul.f32 1.0, %v333
        %v335 = vrcp.pop 4096.0
        %v336 = vmul.f32 4096.0, %v335
        %v337 = vsub.f32 1.0, %v336
        %v338 = vmul.f32 %v335, %v337
        %v339 = vadd.f32 %v335, %v338
        %vm340 = vweird.f32 %v335
        %v341 = vsel %vm340, %v335, %v339
        %v342 = vmul.f32 %v317, %v341
        %v343 = vsub.f32 %v342, %v291
        %v344 = vmul.f32 %v343, %v334
        %345 = vst [vmem:[%s265] sm:$0x1] %v344
        %v346 = vmin.f32 %v275, %v276
        %v347 = vmin.f32 %v277, %v278
        %v348 = vmin.f32 %v346, %v347
        %349 = vmin.xlane.f32.xlu0 %v348
        %v350 = vpop.xlane.xlu0 %349
        %v351 = vrot.slane %v350, 4
        %v352 = vmin.f32 %v350, %v351
        %v353 = vrot.slane %v352, 2
        %v354 = vmin.f32 %v352, %v353
        %v355 = vrot.slane %v354, 1
        %v356 = vmin.f32 %v354, %v355
        %s357 = vtos %v356
        %v358 = vstv %s357
        %v359 = vmax.f32 %v275, %v276
        %v360 = vmax.f32 %v277, %v278
        %v361 = vmax.f32 %v359, %v360
        %362 = vmax.xlane.f32.xlu0 %v361
        %v363 = vpop.xlane.xlu0 %362
        %v364 = vrot.slane %v363, 4
        %v365 = vmax.f32 %v363, %v364
        %v366 = vrot.slane %v365, 2
        %v367 = vmax.f32 %v365, %v366
        %v368 = vrot.slane %v367, 1
        %v369 = vmax.f32 %v367, %v368
        %s370 = vtos %v369
        %v371 = vstv %s370
        %v372 = vadd.f32 %v275, %v276
        %v373 = vadd.f32 %v372, %v277
        %v374 = vadd.f32 %v373, %v278
        %375 = vadd.xlane.f32.xlu0 %v374
        %v376 = vpop.xlane.xlu0 %375
        %v377 = vrot.slane %v376, 4
        %v378 = vadd.f32 %v376, %v377
        %v379 = vrot.slane %v378, 2
        %v380 = vadd.f32 %v378, %v379
        %v381 = vrot.slane %v380, 1
        %v382 = vadd.f32 %v380, %v381
        %s383 = vtos %v382
        %v384 = vstv %s383
        %v385 = vsub.f32 %v371, %v358
        %v386 = vadd.f32 %v385, 1e-06
        %v387 = vrcp.pop %v386
        %v388 = vmul.f32 %v386, %v387
        %v389 = vsub.f32 1.0, %v388
        %v390 = vmul.f32 %v387, %v389
        %v391 = vadd.f32 %v387, %v390
        %vm392 = vweird.f32 %v386
        %vm393 = vweird.f32 %v387
        %vm394 = vmor %vm392, %vm393
        %v395 = vsel %vm394, %v387, %v391
        %v396 = vand.u32 2147483647, %v386
        %vm397 = vcmp.eq.f32.partialorder %v396, 8.507059e+37
        %v398 = vand.u32 %v386, 2147483648
        %v399 = vor.u32 1.1754944e-38, %v398
        %v400 = vsel %vm397, %v399, %v395
        %v401 = vmul.f32 1.0, %v400
        %v402 = vmul.f32 %v384, %v341
        %v403 = vsub.f32 %v402, %v358
        %v404 = vmul.f32 %v403, %v401
        %405 = vst [vmem:[%s265 + $0x1] sm:$0x1] %v404
        %s406 = sld [smem:[#allocation2]]
        %v407 = vstv %s406
        %v408 = vmul.f32 %v407, %v334
        %v409 = vsub.f32 0.0, %v291
        %v410 = vmul.f32 %v409, %v408
        %v411 = vmul.f32 %v270, %v408
        %v412 = vmul.f32 %v271, %v408
        %v413 = vmul.f32 %v272, %v408
        %v414 = vmul.f32 %v273, %v408
        %s415 = sld [smem:[#allocation2 + $0x80]]
        %v416 = vstv %s415
        %v417 = vmul.f32 %v416, %v401
        %v418 = vsub.f32 0.0, %v358
        %v419 = vmul.f32 %v418, %v417
        %v420 = vadd.f32 %v410, %v419
        %v421 = vmul.f32 %v275, %v417
        %v422 = vmul.f32 %v276, %v417
        %v423 = vmul.f32 %v277, %v417
        %v424 = vmul.f32 %v278, %v417
        %v425 = vadd.f32 %v411, %v421
        %v426 = vadd.f32 %v412, %v422
        %v427 = vadd.f32 %v413, %v423
        %v428 = vadd.f32 %v414, %v424
        %v429 = vadd.f32 %v425, %v420
        %v430 = vadd.f32 %v426, %v420
        %v431 = vadd.f32 %v427, %v420
        %v432 = vadd.f32 %v428, %v420
        %433 = vst [vmem:[%s257] sm:$0xff] %v429
        %434 = vst [vmem:[%s257 + $0x8] sm:$0xff] %v430
        %435 = vst [vmem:[%s257 + $0x10] sm:$0xff] %v431
        %436 = vst [vmem:[%s257 + $0x18] sm:$0xff] %v432
        %s437 = sld [smem:[#allocation2 + $0x1]]
        %v438 = vstv %s437
        %v439 = vmul.f32 %v438, %v334
        %v440 = vmul.f32 %v409, %v439
        %v441 = vmul.f32 %v270, %v439
        %v442 = vmul.f32 %v271, %v439
        %v443 = vmul.f32 %v272, %v439
        %v444 = vmul.f32 %v273, %v439
        %s445 = sld [smem:[#allocation2 + $0x81]]
        %v446 = vstv %s445
        %v447 = vmul.f32 %v446, %v401
        %v448 = vmul.f32 %v418, %v447
        %v449 = vadd.f32 %v440, %v448
        %v450 = vmul.f32 %v275, %v447
        %v451 = vmul.f32 %v276, %v447
        %v452 = vmul.f32 %v277, %v447
        %v453 = vmul.f32 %v278, %v447
        %v454 = vadd.f32 %v441, %v450
        %v455 = vadd.f32 %v442, %v451
        %v456 = vadd.f32 %v443, %v452
        %v457 = vadd.f32 %v444, %v453
        %v458 = vadd.f32 %v454, %v449
        %v459 = vadd.f32 %v455, %v449
        %v460 = vadd.f32 %v456, %v449
        %v461 = vadd.f32 %v457, %v449
        %s462 = scalar_lea.vmem %s257, 32
        %463 = vst [vmem:[%s462] sm:$0xff] %v458
        %464 = vst [vmem:[%s462 + $0x8] sm:$0xff] %v459
        %465 = vst [vmem:[%s462 + $0x10] sm:$0xff] %v460
        %466 = vst [vmem:[%s462 + $0x18] sm:$0xff] %v461
        %s467 = sld [smem:[#allocation2 + $0x2]]
        %v468 = vstv %s467
        %v469 = vmul.f32 %v468, %v334
        %v470 = vmul.f32 %v409, %v469
        %v471 = vmul.f32 %v270, %v469
        %v472 = vmul.f32 %v271, %v469
        %v473 = vmul.f32 %v272, %v469
        %v474 = vmul.f32 %v273, %v469
        %s475 = sld [smem:[#allocation2 + $0x82]]
        %v476 = vstv %s475
        %v477 = vmul.f32 %v476, %v401
        %v478 = vmul.f32 %v418, %v477
        %v479 = vadd.f32 %v470, %v478
        %v480 = vmul.f32 %v275, %v477
        %v481 = vmul.f32 %v276, %v477
        %v482 = vmul.f32 %v277, %v477
        %v483 = vmul.f32 %v278, %v477
        %v484 = vadd.f32 %v471, %v480
        %v485 = vadd.f32 %v472, %v481
        %v486 = vadd.f32 %v473, %v482
        %v487 = vadd.f32 %v474, %v483
        %v488 = vadd.f32 %v484, %v479
        %v489 = vadd.f32 %v485, %v479
        %v490 = vadd.f32 %v486, %v479
        %v491 = vadd.f32 %v487, %v479
        %s492 = scalar_lea.vmem %s257, 64
        %493 = vst [vmem:[%s492] sm:$0xff] %v488
        %494 = vst [vmem:[%s492 + $0x8] sm:$0xff] %v489
        %495 = vst [vmem:[%s492 + $0x10] sm:$0xff] %v490
        %496 = vst [vmem:[%s492 + $0x18] sm:$0xff] %v491
        %v497 = vmin.f32 %v488, %v489
        %v498 = vmin.f32 %v490, %v491
        %v499 = vmin.f32 %v497, %v498
        %500 = vmin.xlane.f32.xlu0 %v499
        %v501 = vpop.xlane.xlu0 %500
        %v502 = vrot.slane %v501, 4
        %v503 = vmin.f32 %v501, %v502
        %v504 = vrot.slane %v503, 2
        %v505 = vmin.f32 %v503, %v504
        %v506 = vrot.slane %v505, 1
        %v507 = vmin.f32 %v505, %v506
        %s508 = vtos %v507
        %v509 = vstv %s508
        %v510 = vmax.f32 %v488, %v489
        %v511 = vmax.f32 %v490, %v491
        %v512 = vmax.f32 %v510, %v511
        %513 = vmax.xlane.f32.xlu0 %v512
        %v514 = vpop.xlane.xlu0 %513
        %v515 = vrot.slane %v514, 4
        %v516 = vmax.f32 %v514, %v515
        %v517 = vrot.slane %v516, 2
        %v518 = vmax.f32 %v516, %v517
        %v519 = vrot.slane %v518, 1
        %v520 = vmax.f32 %v518, %v519
        %s521 = vtos %v520
        %v522 = vstv %s521
        %v523 = vsub.f32 %v522, %v509
        %v524 = vadd.f32 %v523, 1e-06
        %v525 = vrcp.pop %v524
        %v526 = vmul.f32 %v524, %v525
        %v527 = vsub.f32 1.0, %v526
        %v528 = vmul.f32 %v525, %v527
        %v529 = vadd.f32 %v525, %v528
        %vm530 = vweird.f32 %v524
        %vm531 = vweird.f32 %v525
        %vm532 = vmor %vm530, %vm531
        %v533 = vsel %vm532, %v525, %v529
        %v534 = vand.u32 2147483647, %v524
        %vm535 = vcmp.eq.f32.partialorder %v534, 8.507059e+37
        %v536 = vand.u32 %v524, 2147483648
        %v537 = vor.u32 1.1754944e-38, %v536
        %v538 = vsel %vm535, %v537, %v533
        %v539 = vmul.f32 1.0, %v538
        %v540 = vsub.f32 %v488, %v509
        %v541 = vsub.f32 %v489, %v509
        %v542 = vsub.f32 %v490, %v509
        %v543 = vsub.f32 %v491, %v509
        %v544 = vmul.f32 %v540, %v539
        %v545 = vmul.f32 %v541, %v539
        %v546 = vmul.f32 %v542, %v539
        %v547 = vmul.f32 %v543, %v539
        %v548 = vmul.f32 %v544, 8.0
        %v549 = vmul.f32 %v545, 8.0
        %v550 = vmul.f32 %v546, 8.0
        %v551 = vmul.f32 %v547, 8.0
        %v552 = vcvt.f32.s32.to.zero.pseudo %v548
        %v553 = vcvt.f32.s32.to.zero.pseudo %v549
        %v554 = vcvt.f32.s32.to.zero.pseudo %v550
        %v555 = vcvt.f32.s32.to.zero.pseudo %v551
        %vm556 = vcmp.gt.s32.totalorder %v552, 0
        %v557 = vsel %vm556, %v552, 0
        %vm558 = vcmp.gt.s32.totalorder %v553, 0
        %v559 = vsel %vm558, %v553, 0
        %vm560 = vcmp.gt.s32.totalorder %v554, 0
        %v561 = vsel %vm560, %v554, 0
        %vm562 = vcmp.gt.s32.totalorder %v555, 0
        %v563 = vsel %vm562, %v555, 0
        %vm564 = vcmp.lt.s32.totalorder %v557, 7
        %v565 = vsel %vm564, %v557, 7
        %vm566 = vcmp.lt.s32.totalorder %v559, 7
        %v567 = vsel %vm566, %v559, 7
        %vm568 = vcmp.lt.s32.totalorder %v561, 7
        %v569 = vsel %vm568, %v561, 7
        %vm570 = vcmp.lt.s32.totalorder %v563, 7
        %v571 = vsel %vm570, %v563, 7
        %v572 = vpack.c.b16 %v567, %v565
        %v573 = vpack.c.b16 %v571, %v569
        %v574 = vpack.c.b8 %v573, %v572
        %575 = vst [vmem:[%s261] sm:$0xff] %v574
        %vm576 = vcmp.eq.s32.totalorder %v565, 0
        %vm577 = vcmp.eq.s32.totalorder %v567, 0
        %vm578 = vcmp.eq.s32.totalorder %v569, 0
        %vm579 = vcmp.eq.s32.totalorder %v571, 0
        %v580 = vsel %vm576, 1, 0
        %v581 = vsel %vm577, 1, 0
        %v582 = vsel %vm578, 1, 0
        %v583 = vsel %vm579, 1, 0
        %v584 = vadd.s32 %v580, %v581
        %v585 = vadd.s32 %v582, %v583
        %v586 = vadd.s32 %v584, %v585
        %v587 = vrot.slane %v586, 4
        %v588 = vadd.s32 %v586, %v587
        %v589 = vrot.slane %v588, 2
        %v590 = vadd.s32 %v588, %v589
        %v591 = vrot.slane %v590, 1
        %v592 = vadd.s32 %v590, %v591
        %593 = vst [vmem:[%s269] sm:$0x1] %v592
        %v594 = vsub.s32 32, %v592
        %vm595 = vcmp.eq.s32.totalorder %v565, 1
        %vm596 = vcmp.eq.s32.totalorder %v567, 1
        %vm597 = vcmp.eq.s32.totalorder %v569, 1
        %vm598 = vcmp.eq.s32.totalorder %v571, 1
        %v599 = vsel %vm595, 1, 0
        %v600 = vsel %vm596, 1, 0
        %v601 = vsel %vm597, 1, 0
        %v602 = vsel %vm598, 1, 0
        %v603 = vadd.s32 %v599, %v600
        %v604 = vadd.s32 %v601, %v602
        %v605 = vadd.s32 %v603, %v604
        %v606 = vrot.slane %v605, 4
        %v607 = vadd.s32 %v605, %v606
        %v608 = vrot.slane %v607, 2
        %v609 = vadd.s32 %v607, %v608
        %v610 = vrot.slane %v609, 1
        %v611 = vadd.s32 %v609, %v610
        %612 = vst [vmem:[%s269 + $0x1] sm:$0x1] %v611
        %v613 = vsub.s32 %v594, %v611
        %vm614 = vcmp.eq.s32.totalorder %v565, 2
        %vm615 = vcmp.eq.s32.totalorder %v567, 2
        %vm616 = vcmp.eq.s32.totalorder %v569, 2
        %vm617 = vcmp.eq.s32.totalorder %v571, 2
        %v618 = vsel %vm614, 1, 0
        %v619 = vsel %vm615, 1, 0
        %v620 = vsel %vm616, 1, 0
        %v621 = vsel %vm617, 1, 0
        %v622 = vadd.s32 %v618, %v619
        %v623 = vadd.s32 %v620, %v621
        %v624 = vadd.s32 %v622, %v623
        %v625 = vrot.slane %v624, 4
        %v626 = vadd.s32 %v624, %v625
        %v627 = vrot.slane %v626, 2
        %v628 = vadd.s32 %v626, %v627
        %v629 = vrot.slane %v628, 1
        %v630 = vadd.s32 %v628, %v629
        %631 = vst [vmem:[%s269 + $0x2] sm:$0x1] %v630
        %v632 = vsub.s32 %v613, %v630
        %vm633 = vcmp.eq.s32.totalorder %v565, 3
        %vm634 = vcmp.eq.s32.totalorder %v567, 3
        %vm635 = vcmp.eq.s32.totalorder %v569, 3
        %vm636 = vcmp.eq.s32.totalorder %v571, 3
        %v637 = vsel %vm633, 1, 0
        %v638 = vsel %vm634, 1, 0
        %v639 = vsel %vm635, 1, 0
        %v640 = vsel %vm636, 1, 0
        %v641 = vadd.s32 %v637, %v638
        %v642 = vadd.s32 %v639, %v640
        %v643 = vadd.s32 %v641, %v642
        %v644 = vrot.slane %v643, 4
        %v645 = vadd.s32 %v643, %v644
        %v646 = vrot.slane %v645, 2
        %v647 = vadd.s32 %v645, %v646
        %v648 = vrot.slane %v647, 1
        %v649 = vadd.s32 %v647, %v648
        %650 = vst [vmem:[%s269 + $0x3] sm:$0x1] %v649
        %v651 = vsub.s32 %v632, %v649
        %vm652 = vcmp.eq.s32.totalorder %v565, 4
        %vm653 = vcmp.eq.s32.totalorder %v567, 4
        %vm654 = vcmp.eq.s32.totalorder %v569, 4
        %vm655 = vcmp.eq.s32.totalorder %v571, 4
        %v656 = vsel %vm652, 1, 0
        %v657 = vsel %vm653, 1, 0
        %v658 = vsel %vm654, 1, 0
        %v659 = vsel %vm655, 1, 0
        %v660 = vadd.s32 %v656, %v657
        %v661 = vadd.s32 %v658, %v659
        %v662 = vadd.s32 %v660, %v661
        %v663 = vrot.slane %v662, 4
        %v664 = vadd.s32 %v662, %v663
        %v665 = vrot.slane %v664, 2
        %v666 = vadd.s32 %v664, %v665
        %v667 = vrot.slane %v666, 1
        %v668 = vadd.s32 %v666, %v667
        %669 = vst [vmem:[%s269 + $0x4] sm:$0x1] %v668
        %v670 = vsub.s32 %v651, %v668
        %vm671 = vcmp.eq.s32.totalorder %v565, 5
        %vm672 = vcmp.eq.s32.totalorder %v567, 5
        %vm673 = vcmp.eq.s32.totalorder %v569, 5
        %vm674 = vcmp.eq.s32.totalorder %v571, 5
        %v675 = vsel %vm671, 1, 0
        %v676 = vsel %vm672, 1, 0
        %v677 = vsel %vm673, 1, 0
        %v678 = vsel %vm674, 1, 0
        %v679 = vadd.s32 %v675, %v676
        %v680 = vadd.s32 %v677, %v678
        %v681 = vadd.s32 %v679, %v680
        %v682 = vrot.slane %v681, 4
        %v683 = vadd.s32 %v681, %v682
        %v684 = vrot.slane %v683, 2
        %v685 = vadd.s32 %v683, %v684
        %v686 = vrot.slane %v685, 1
        %v687 = vadd.s32 %v685, %v686
        %688 = vst [vmem:[%s269 + $0x5] sm:$0x1] %v687
        %v689 = vsub.s32 %v670, %v687
        %vm690 = vcmp.eq.s32.totalorder %v565, 6
        %vm691 = vcmp.eq.s32.totalorder %v567, 6
        %vm692 = vcmp.eq.s32.totalorder %v569, 6
        %vm693 = vcmp.eq.s32.totalorder %v571, 6
        %v694 = vsel %vm690, 1, 0
        %v695 = vsel %vm691, 1, 0
        %v696 = vsel %vm692, 1, 0
        %v697 = vsel %vm693, 1, 0
        %v698 = vadd.s32 %v694, %v695
        %v699 = vadd.s32 %v696, %v697
        %v700 = vadd.s32 %v698, %v699
        %v701 = vrot.slane %v700, 4
        %v702 = vadd.s32 %v700, %v701
        %v703 = vrot.slane %v702, 2
        %v704 = vadd.s32 %v702, %v703
        %v705 = vrot.slane %v704, 1
        %v706 = vadd.s32 %v704, %v705
        %707 = vst [vmem:[%s269 + $0x6] sm:$0x1] %v706
        %v708 = vsub.s32 %v689, %v706
        %709 = vst [vmem:[%s269 + $0x7] sm:$0x1] %v708
        %p710 = scmp.lt.s32.totalorder %s18, 1
        %s711 = scalar_select %p710, %s18, 1
        %s712 = smul.addr %s711, 12
        %s713 = smul.addr %s712, 8
        %s714 = scalar_lea.vmem %s2, %s713
        %p715 = scmp.lt.s32.totalorder %s18, 1
        %s716 = scalar_select %p715, %s18, 1
        %s717 = smul.addr %s716, 8
        %s718 = scalar_lea.vmem %s3, %s717
        %p719 = scmp.lt.s32.totalorder %s18, 1
        %s720 = scalar_select %p719, %s18, 1
        %s721 = smul.addr %s720, 2
        %s722 = scalar_lea.vmem %s4, %s721
        %p723 = scmp.lt.s32.totalorder %s18, 1
        %s724 = scalar_select %p723, %s18, 1
        %s725 = smul.addr %s724, 8
        %s726 = scalar_lea.vmem %s5, %s725
        // Predicated region
        $region33: #{my_cellpose_forward.2} parent=27 // pred_check
          %p727 = pneg %p83
        $region34: #{my_cellpose_forward.2} parent=27 // pred_check_branch
          %729 = sbr.rel (%p727) target = $region36
        $region35: #{my_cellpose_forward.2} parent=27 // pred_region
          _
        $region36: #{my_cellpose_forward.2} parent=27 // pred_fallthru
          _
        // Predicated region
        $region37: #{my_cellpose_forward.2} parent=27 // pred_check
          %p730 = pneg %p109
        $region38: #{my_cellpose_forward.2} parent=27 // pred_check_branch
          %732 = sbr.rel (%p730) target = $region40
        $region39: #{my_cellpose_forward.2} parent=27 // pred_region
          _
        $region40: #{my_cellpose_forward.2} parent=27 // pred_fallthru
          _
        // Predicated region
        $region41: #{my_cellpose_forward.2} parent=27 // pred_check
          %p733 = pneg %p135
        $region42: #{my_cellpose_forward.2} parent=27 // pred_check_branch
          %735 = sbr.rel (%p733) target = $region44
        $region43: #{my_cellpose_forward.2} parent=27 // pred_region
          _
        $region44: #{my_cellpose_forward.2} parent=27 // pred_fallthru
          _
        // Predicated region
        $region45: #{my_cellpose_forward.2} parent=27 // pred_check
          %p736 = pneg %p161
        $region46: #{my_cellpose_forward.2} parent=27 // pred_check_branch
          %738 = sbr.rel (%p736) target = $region48
        $region47: #{my_cellpose_forward.2} parent=27 // pred_region
          _
        $region48: #{my_cellpose_forward.2} parent=27 // pred_fallthru
          _
      $region28: #{my_cellpose_forward.2} parent=5 // pred_fallthru
        _
      %p739 = scmp.le.s32.totalorder 2, %s13
      // Predicated region
      $region49: #{my_cellpose_forward.2} parent=5 // pred_check
        %p740 = pneg %p739
      $region50: #{my_cellpose_forward.2} parent=5 // pred_check_branch
        %742 = sbr.rel (%p740) target = $region52
      $region51: #{my_cellpose_forward.2} parent=5 // pred_region
        %s743 = ssub.s32 %s13, 2
        // Predicated region
        $region53: #{my_cellpose_forward.2} parent=51 // pred_check
          %p744 = pneg %p89
        $region54: #{my_cellpose_forward.2} parent=51 // pred_check_branch
          %746 = sbr.rel (%p744) target = $region56
        $region55: #{my_cellpose_forward.2} parent=51 // pred_region
          %p747 = scmp.lt.s32.totalorder %s19, 1
          %s748 = scalar_select %p747, %s19, 1
          %s749 = smul.addr %s748, 12
          %s750 = smul.addr %s749, 8
          %s751 = scalar_lea.vmem %s2, %s750
        $region56: #{my_cellpose_forward.2} parent=51 // pred_fallthru
          _
        // Predicated region
        $region57: #{my_cellpose_forward.2} parent=51 // pred_check
          %p752 = pneg %p115
        $region58: #{my_cellpose_forward.2} parent=51 // pred_check_branch
          %754 = sbr.rel (%p752) target = $region60
        $region59: #{my_cellpose_forward.2} parent=51 // pred_region
          %p755 = scmp.lt.s32.totalorder %s19, 1
          %s756 = scalar_select %p755, %s19, 1
          %s757 = smul.addr %s756, 8
          %s758 = scalar_lea.vmem %s3, %s757
        $region60: #{my_cellpose_forward.2} parent=51 // pred_fallthru
          _
        // Predicated region
        $region61: #{my_cellpose_forward.2} parent=51 // pred_check
          %p759 = pneg %p141
        $region62: #{my_cellpose_forward.2} parent=51 // pred_check_branch
          %761 = sbr.rel (%p759) target = $region64
        $region63: #{my_cellpose_forward.2} parent=51 // pred_region
          %p762 = scmp.lt.s32.totalorder %s19, 1
          %s763 = scalar_select %p762, %s19, 1
          %s764 = smul.addr %s763, 2
          %s765 = scalar_lea.vmem %s4, %s764
        $region64: #{my_cellpose_forward.2} parent=51 // pred_fallthru
          _
        // Predicated region
        $region65: #{my_cellpose_forward.2} parent=51 // pred_check
          %p766 = pneg %p167
        $region66: #{my_cellpose_forward.2} parent=51 // pred_check_branch
          %768 = sbr.rel (%p766) target = $region68
        $region67: #{my_cellpose_forward.2} parent=51 // pred_region
          %p769 = scmp.lt.s32.totalorder %s19, 1
          %s770 = scalar_select %p769, %s19, 1
          %s771 = smul.addr %s770, 8
          %s772 = scalar_lea.vmem %s5, %s771
        $region68: #{my_cellpose_forward.2} parent=51 // pred_fallthru
          _
      $region52: #{my_cellpose_forward.2} parent=5 // pred_fallthru
        _
    $region6: #{my_cellpose_forward.2} parent=1 // loop_footer
      %s17 = sadd.s32 1, %s13
    $region7: #{my_cellpose_forward.2} parent=1 // loop_footer_branch
      %12 = sbr.rel target = $region3
    $region8: #{my_cellpose_forward.2} parent=1 // loop_exit
      _
    %773 = vsyncpa [#allocation3], 1
    %s774 = scalar_lea.sflag [#allocation3], 1
    %775 = vsyncpa %s774, 1

</llo_original>
